<compile_context>
chip_gen: v6e
topology: v6e:2x2x1
jax: 0.10.0
libtpu: 0.0.40
codegen_flags: <defaults>
</compile_context>

<pallas_src>
import jax
import jax.numpy as jnp
from jax import lax
from jax.experimental import pallas as pl
from jax.experimental.pallas import tpu as pltpu

HIDDEN = 50          # logical LSTM hidden size (PyTorch module)
HP = 128             # padded hidden size used inside the kernel (lane multiple)
GATE_ORDER = (0, 1, 3, 2)   # PyTorch (i,f,g,o) -> kernel (i,f,o,g): sigmoids contiguous


def _lstm_linear_kernel(x_ref,       # (T_tile, B, 1)  time-major input chunk
                        p_ref,       # (B, P, T_tile)  params chunk, lane-dense in T
                        w_ih_ref,    # (1, 4*HP)       padded, gate-reordered W_ih^T
                        w_hh_ref,    # (HP, 4*HP)      padded, gate-reordered W_hh^T
                        b_ref,       # (1, 4*HP)       padded, gate-reordered (b_ih + b_hh)
                        w_h_ref,     # (1, 1, HP)      padded linear weight (LSTM part)
                        w_p_ref,     # (1, P, 1)       linear weight (params part)
                        b_lin_ref,   # (1, 1)          linear bias
                        out_ref,     # (B, T_tile)     output chunk, lane-dense in T
                        h_sc,        # (B, HP) VMEM    hidden state (persists over chunks)
                        c_sc,        # (B, HP) VMEM    cell state   (persists over chunks)
                        h_all_sc,    # (T_tile, B, HP) VMEM  per-step hidden states
                        xg_sc):      # (T_tile, B, 4*HP) VMEM  precomputed x-proj + bias
    T_tile = x_ref.shape[0]
    H = h_sc.shape[1]              # = HP

    # Zero-init the recurrent state only on the first time-chunk.
    @pl.when(pl.program_id(0) == 0)
    def _():
        h_sc[...] = jnp.zeros_like(h_sc)
        c_sc[...] = jnp.zeros_like(c_sc)

    # Hoist loop-invariant weight load out of the serial recurrence.
    w_hh = w_hh_ref[...]           # (HP, 4*HP)

    # Precompute input projection + gate bias for the whole chunk: full-lane VPU
    # work off the serial critical path.  (T_tile, B, 1)*(1, 4*HP) -> (T_tile, B, 4*HP)
    xg_sc[...] = x_ref[...] * w_ih_ref[...] + b_ref[...]

    def step(t, carry):
        h, c = carry
        gates = xg_sc[t] + jnp.dot(h, w_hh, preferred_element_type=jnp.float32)

        # Gate order (i, f, o, g): one contiguous sigmoid slab + one tanh.
        sig = jax.nn.sigmoid(gates[:, :3 * H])
        g_g = jnp.tanh(gates[:, 3 * H:])
        i_g = sig[:, 0 * H:1 * H]
        f_g = sig[:, 1 * H:2 * H]
        o_g = sig[:, 2 * H:3 * H]

        c_new = f_g * c + i_g * g_g
        h_new = o_g * jnp.tanh(c_new)

        h_all_sc[t] = h_new        # dense 128-lane store, no output math in the loop
        return h_new, c_new

    h_fin, c_fin = lax.fori_loop(0, T_tile, step, (h_sc[...], c_sc[...]),
                                 unroll=min(16, T_tile))
    h_sc[...] = h_fin
    c_sc[...] = c_fin

    # Output projection for the whole chunk (off the serial critical path):
    #   out[b, t] = sum_h h[t,b,h]*w_h[h] + sum_p params[b,p,t]*w_p[p] + b_lin
    hw = jnp.sum(h_all_sc[...] * w_h_ref[...], axis=-1)      # (T_tile, B)
    pw = jnp.sum(p_ref[...] * w_p_ref[...], axis=1)          # (B, T_tile)
    out_ref[...] = (hw.T + pw + b_lin_ref[...]).astype(out_ref.dtype)


def _pad_gate_cols(m, H, HPad):
    """(rows, 4H) -> (rows, 4*HPad): reorder gate blocks (i,f,g,o)->(i,f,o,g) and
    zero-pad each gate block from H to HPad columns."""
    rows = m.shape[0]
    m4 = m.reshape(rows, 4, H)
    m4 = m4[:, list(GATE_ORDER), :]
    m4 = jnp.pad(m4, ((0, 0), (0, 0), (0, HPad - H)))
    return m4.reshape(rows, 4 * HPad)


@jax.jit
def super_music_model_pallas(x, params, weights):
    """x: (B, T, 1) f32, params: (B, T, P) f32 -> (B, T, 1) f32."""
    w_ih, w_hh, b_ih, b_hh, w_lin, b_lin = weights
    B, T, _ = x.shape
    P = params.shape[2]
    H = HIDDEN

    # ---- weight prep (wrapper glue): pad hidden 50 -> HP=128, reorder gates ----
    w_ih_p = _pad_gate_cols(w_ih.T, H, HP)                        # (1, 4*HP)
    w_hh_p = jnp.pad(_pad_gate_cols(w_hh.T, H, HP),
                     ((0, HP - H), (0, 0)))                       # (HP, 4*HP)
    b_p = _pad_gate_cols((b_ih + b_hh).reshape(1, 4 * H), H, HP)  # (1, 4*HP)
    w_h_p = jnp.pad(w_lin[:, :H], ((0, 0), (0, HP - H))).reshape(1, 1, HP)
    w_p_p = w_lin[:, H:].reshape(1, P, 1)
    b_lin_p = b_lin.reshape(1, 1)

    # ---- time chunking (bounds VMEM, double-buffers DMA behind recurrence) ----
    MAX_T_TILE = 512     # amortizes per-grid-step overhead; all chunk buffers stay small
    if T <= MAX_T_TILE:
        T_tile = T
        T_pad = T
    else:
        T_tile = MAX_T_TILE
        T_pad = pl.cdiv(T, T_tile) * T_tile
    num_chunks = T_pad // T_tile

    # ---- activation layouts ----
    x_tm = jnp.transpose(x, (1, 0, 2))            # (T, B, 1)  time-major
    p_bpt = jnp.transpose(params, (0, 2, 1))      # (B, P, T)  lane-dense in T
    if T_pad != T:
        x_tm = jnp.pad(x_tm, ((0, T_pad - T), (0, 0), (0, 0)))
        p_bpt = jnp.pad(p_bpt, ((0, 0), (0, 0), (0, T_pad - T)))

    grid_spec = pltpu.PrefetchScalarGridSpec(
        num_scalar_prefetch=0,
        grid=(num_chunks,),
        in_specs=[
            pl.BlockSpec((T_tile, B, 1), lambda i: (i, 0, 0)),     # x chunk
            pl.BlockSpec((B, P, T_tile), lambda i: (0, 0, i)),     # params chunk
            pl.BlockSpec((1, 4 * HP), lambda i: (0, 0)),           # W_ih^T
            pl.BlockSpec((HP, 4 * HP), lambda i: (0, 0)),          # W_hh^T
            pl.BlockSpec((1, 4 * HP), lambda i: (0, 0)),           # gate bias
            pl.BlockSpec((1, 1, HP), lambda i: (0, 0, 0)),         # w_h
            pl.BlockSpec((1, P, 1), lambda i: (0, 0, 0)),          # w_p
            pl.BlockSpec((1, 1), lambda i: (0, 0)),                # b_lin
        ],
        out_specs=pl.BlockSpec((B, T_tile), lambda i: (0, i)),
        scratch_shapes=[
            pltpu.VMEM((B, HP), jnp.float32),             # h (persists across chunks)
            pltpu.VMEM((B, HP), jnp.float32),             # c (persists across chunks)
            pltpu.VMEM((T_tile, B, HP), jnp.float32),     # per-step hidden states
            pltpu.VMEM((T_tile, B, 4 * HP), jnp.float32), # precomputed x-proj + bias
        ],
    )

    out_bt = pl.pallas_call(
        _lstm_linear_kernel,
        out_shape=jax.ShapeDtypeStruct((B, T_pad), jnp.float32),
        grid_spec=grid_spec,
        compiler_params=pltpu.CompilerParams(
            dimension_semantics=("arbitrary",),        # time chunks are sequential
            vmem_limit_bytes=32 * 1024 * 1024),
    )(x_tm, p_bpt, w_ih_p, w_hh_p, b_p, w_h_p, w_p_p, b_lin_p)

    return out_bt[:, :T][:, :, None]                   # (B, T, 1)


def init_weights(key, num_params):
    """Deterministic init mimicking PyTorch's uniform(-1/sqrt(fan), 1/sqrt(fan))."""
    H = HIDDEN
    ks = jax.random.split(key, 6)
    bound_lstm = 1.0 / jnp.sqrt(H)
    bound_lin = 1.0 / jnp.sqrt(H + num_params)
    w_ih = jax.random.uniform(ks[0], (4 * H, 1), jnp.float32, -bound_lstm, bound_lstm)
    w_hh = jax.random.uniform(ks[1], (4 * H, H), jnp.float32, -bound_lstm, bound_lstm)
    b_ih = jax.random.uniform(ks[2], (4 * H,), jnp.float32, -bound_lstm, bound_lstm)
    b_hh = jax.random.uniform(ks[3], (4 * H,), jnp.float32, -bound_lstm, bound_lstm)
    w_lin = jax.random.uniform(ks[4], (1, H + num_params), jnp.float32, -bound_lin, bound_lin)
    b_lin = jax.random.uniform(ks[5], (1,), jnp.float32, -bound_lin, bound_lin)
    return (w_ih, w_hh, b_ih, b_hh, w_lin, b_lin)


def reference_forward(x, params, weights):
    """Pure-JAX reference of the PyTorch forward (for correctness check)."""
    w_ih, w_hh, b_ih, b_hh, w_lin, b_lin = weights
    B = x.shape[0]
    H = HIDDEN

    def step(carry, x_t):
        h, c = carry
        gates = x_t @ w_ih.T + h @ w_hh.T + b_ih + b_hh
        i = jax.nn.sigmoid(gates[:, 0 * H:1 * H])
        f = jax.nn.sigmoid(gates[:, 1 * H:2 * H])
        g = jnp.tanh(gates[:, 2 * H:3 * H])
        o = jax.nn.sigmoid(gates[:, 3 * H:4 * H])
        c = f * c + i * g
        h = o * jnp.tanh(c)
        return (h, c), h

    h0 = jnp.zeros((B, H), jnp.float32)
    c0 = jnp.zeros((B, H), jnp.float32)
    _, hs = lax.scan(step, (h0, c0), jnp.transpose(x, (1, 0, 2)))
    hs = jnp.transpose(hs, (1, 0, 2))                       # (B, T, H)
    comb = jnp.concatenate([hs, params], axis=2)            # (B, T, H+P)
    return comb @ w_lin.T + b_lin                           # (B, T, 1)


if __name__ == "__main__":
    key = jax.random.PRNGKey(0)

    # case 1: tiny single chunk; case 2: larger single chunk (T<=512);
    # case 3: multi-chunk grid with last-chunk time padding.
    for (B, T, P) in [(2, 8, 4), (2, 256, 4), (2, 700, 4)]:
        k_x, k_p, k_w, key = jax.random.split(key, 4)
        x = jax.random.normal(k_x, (B, T, 1), jnp.float32)
        params = jax.random.normal(k_p, (B, T, P), jnp.float32)
        weights = init_weights(k_w, P)

        out = jax.block_until_ready(super_music_model_pallas(x, params, weights))
        ref = reference_forward(x, params, weights)

        assert out.shape == (B, T, 1), f"bad shape {out.shape} for {(B, T, P)}"
        assert jnp.allclose(out, ref, rtol=1e-3, atol=1e-4), \
            f"mismatch vs reference at {(B, T, P)}"

    print("KERNEL_OK")
</pallas_src>

<mosaic_0001>
module attributes {stable_mosaic.version = 11 : i64} {
  func.func @_lstm_linear_kernel(%arg0: i32, %arg1: memref<8x2x1xf32, #tpu.memory_space<vmem>>, %arg2: memref<2x4x8xf32, #tpu.memory_space<vmem>>, %arg3: memref<1x512xf32, #tpu.memory_space<vmem>>, %arg4: memref<128x512xf32, #tpu.memory_space<vmem>>, %arg5: memref<1x512xf32, #tpu.memory_space<vmem>>, %arg6: memref<1x1x128xf32, #tpu.memory_space<vmem>>, %arg7: memref<1x4x1xf32, #tpu.memory_space<vmem>>, %arg8: memref<1x1xf32, #tpu.memory_space<vmem>>, %arg9: memref<2x8xf32, #tpu.memory_space<vmem>>, %arg10: memref<2x128xf32, #tpu.memory_space<vmem>>, %arg11: memref<2x128xf32, #tpu.memory_space<vmem>>, %arg12: memref<8x2x128xf32, #tpu.memory_space<vmem>>, %arg13: memref<8x2x512xf32, #tpu.memory_space<vmem>>) attributes {dimension_semantics = [#tpu.dimension_semantics<arbitrary>], iteration_bounds = array<i64: 1>, scalar_prefetch = 0 : i64, scratch_operands = 4 : i64, tpu.core_type = #tpu.core_type<tc>, window_params = [{transform_indices = @transform_0, window_bounds = array<i64: 8, 2, 1>}, {transform_indices = @transform_1, window_bounds = array<i64: 2, 4, 8>}, {pipeline_mode = #tpu.pipeline_mode<synchronous>, transform_indices = @transform_2, window_bounds = array<i64: 1, 512>}, {pipeline_mode = #tpu.pipeline_mode<synchronous>, transform_indices = @transform_3, window_bounds = array<i64: 128, 512>}, {pipeline_mode = #tpu.pipeline_mode<synchronous>, transform_indices = @transform_4, window_bounds = array<i64: 1, 512>}, {pipeline_mode = #tpu.pipeline_mode<synchronous>, transform_indices = @transform_5, window_bounds = array<i64: 1, 1, 128>}, {pipeline_mode = #tpu.pipeline_mode<synchronous>, transform_indices = @transform_6, window_bounds = array<i64: 1, 4, 1>}, {pipeline_mode = #tpu.pipeline_mode<synchronous>, transform_indices = @transform_7, window_bounds = array<i64: 1, 1>}, {transform_indices = @transform_8, window_bounds = array<i64: 2, 8>}]} {
    %c0_i32 = arith.constant 0 : i32
    %0 = arith.cmpi eq, %arg0, %c0_i32 : i32
    %1 = arith.extui %0 : i1 to i32
    %c0_i32_0 = arith.constant 0 : i32
    %2 = arith.cmpi ne, %1, %c0_i32_0 : i32
    scf.if %2 {
      %cst_86 = arith.constant 0.000000e+00 : f32
      %235 = vector.broadcast %cst_86 : f32 to vector<2x128xf32>
      %c0_87 = arith.constant 0 : index
      %c0_88 = arith.constant 0 : index
      %236 = vector.load %arg10[%c0_87, %c0_88] : memref<2x128xf32, #tpu.memory_space<vmem>>, vector<2x128xf32>
      tpu.vector_store %arg10[%c0_87, %c0_88], %235 {strides = array<i32>} : memref<2x128xf32, #tpu.memory_space<vmem>>, vector<2x128xf32>,
      %cst_89 = arith.constant 0.000000e+00 : f32
      %237 = vector.broadcast %cst_89 : f32 to vector<2x128xf32>
      %c0_90 = arith.constant 0 : index
      %c0_91 = arith.constant 0 : index
      %238 = vector.load %arg11[%c0_90, %c0_91] : memref<2x128xf32, #tpu.memory_space<vmem>>, vector<2x128xf32>
      tpu.vector_store %arg11[%c0_90, %c0_91], %237 {strides = array<i32>} : memref<2x128xf32, #tpu.memory_space<vmem>>, vector<2x128xf32>,
    } else {
    }
    %c0 = arith.constant 0 : index
    %c0_1 = arith.constant 0 : index
    %3 = vector.load %arg4[%c0, %c0_1] : memref<128x512xf32, #tpu.memory_space<vmem>>, vector<128x512xf32>
    %c0_2 = arith.constant 0 : index
    %c0_3 = arith.constant 0 : index
    %c0_4 = arith.constant 0 : index
    %4 = vector.load %arg1[%c0_2, %c0_3, %c0_4] : memref<8x2x1xf32, #tpu.memory_space<vmem>>, vector<8x2x1xf32>
    %c0_5 = arith.constant 0 : index
    %c0_6 = arith.constant 0 : index
    %5 = vector.load %arg3[%c0_5, %c0_6] : memref<1x512xf32, #tpu.memory_space<vmem>>, vector<1x512xf32>
    %6 = vector.shape_cast %5 : vector<1x512xf32> to vector<1x1x512xf32>
    %7 = vector.broadcast %4 : vector<8x2x1xf32> to vector<8x2x512xf32>
    %8 = vector.broadcast %6 : vector<1x1x512xf32> to vector<8x2x512xf32>
    %9 = arith.mulf %7, %8 : vector<8x2x512xf32>
    %c0_7 = arith.constant 0 : index
    %c0_8 = arith.constant 0 : index
    %10 = vector.load %arg5[%c0_7, %c0_8] : memref<1x512xf32, #tpu.memory_space<vmem>>, vector<1x512xf32>
    %11 = vector.shape_cast %10 : vector<1x512xf32> to vector<1x1x512xf32>
    %12 = vector.broadcast %11 : vector<1x1x512xf32> to vector<8x2x512xf32>
    %13 = arith.addf %9, %12 : vector<8x2x512xf32>
    %c0_9 = arith.constant 0 : index
    %c0_10 = arith.constant 0 : index
    %c0_11 = arith.constant 0 : index
    %14 = vector.load %arg13[%c0_9, %c0_10, %c0_11] : memref<8x2x512xf32, #tpu.memory_space<vmem>>, vector<8x2x512xf32>
    tpu.vector_store %arg13[%c0_9, %c0_10, %c0_11], %13 {strides = array<i32>} : memref<8x2x512xf32, #tpu.memory_space<vmem>>, vector<8x2x512xf32>,
    %c0_12 = arith.constant 0 : index
    %c0_13 = arith.constant 0 : index
    %15 = vector.load %arg10[%c0_12, %c0_13] : memref<2x128xf32, #tpu.memory_space<vmem>>, vector<2x128xf32>
    %c0_14 = arith.constant 0 : index
    %c0_15 = arith.constant 0 : index
    %16 = vector.load %arg11[%c0_14, %c0_15] : memref<2x128xf32, #tpu.memory_space<vmem>>, vector<2x128xf32>
    %c0_i32_16 = arith.constant 0 : i32
    %17 = arith.index_cast %c0_i32_16 : i32 to index
    %c0_17 = arith.constant 0 : index
    %c0_18 = arith.constant 0 : index
    %18 = vector.load %arg13[%17, %c0_17, %c0_18] : memref<8x2x512xf32, #tpu.memory_space<vmem>>, vector<1x2x512xf32>
    %19 = vector.shape_cast %18 : vector<1x2x512xf32> to vector<2x512xf32>
    %cst = arith.constant dense<0.000000e+00> : vector<2x512xf32>
    %20 = tpu.matmul %15, %3, %cst {dimension_numbers = #tpu.dot_dimension_numbers<[1], [0], [0], [1], [0, 0, 1, 1], [], []>} : vector<2x128xf32>, vector<128x512xf32>, vector<2x512xf32> -> vector<2x512xf32>
    %21 = arith.addf %19, %20 : vector<2x512xf32>
    %22 = vector.extract_strided_slice %21 {offsets = [0, 0], sizes = [2, 384], strides = [1, 1]} : vector<2x512xf32> to vector<2x384xf32>
    %23 = arith.negf %22 : vector<2x384xf32>
    %24 = math.exp %23 : vector<2x384xf32>
    %cst_19 = arith.constant 1.000000e+00 : f32
    %25 = vector.broadcast %cst_19 : f32 to vector<2x384xf32>
    %26 = arith.addf %25, %24 : vector<2x384xf32>
    %27 = arith.divf %25, %26 : vector<2x384xf32>
    %28 = vector.extract_strided_slice %21 {offsets = [0, 384], sizes = [2, 128], strides = [1, 1]} : vector<2x512xf32> to vector<2x128xf32>
    %29 = math.tanh %28 : vector<2x128xf32>
    %30 = vector.extract_strided_slice %27 {offsets = [0, 0], sizes = [2, 128], strides = [1, 1]} : vector<2x384xf32> to vector<2x128xf32>
    %31 = vector.extract_strided_slice %27 {offsets = [0, 128], sizes = [2, 128], strides = [1, 1]} : vector<2x384xf32> to vector<2x128xf32>
    %32 = vector.extract_strided_slice %27 {offsets = [0, 256], sizes = [2, 128], strides = [1, 1]} : vector<2x384xf32> to vector<2x128xf32>
    %33 = arith.mulf %31, %16 : vector<2x128xf32>
    %34 = arith.mulf %30, %29 : vector<2x128xf32>
    %35 = arith.addf %33, %34 : vector<2x128xf32>
    %36 = math.tanh %35 : vector<2x128xf32>
    %37 = arith.mulf %32, %36 : vector<2x128xf32>
    %38 = arith.index_cast %c0_i32_16 : i32 to index
    %c0_20 = arith.constant 0 : index
    %c0_21 = arith.constant 0 : index
    %39 = vector.load %arg12[%38, %c0_20, %c0_21] : memref<8x2x128xf32, #tpu.memory_space<vmem>>, vector<1x2x128xf32>
    %40 = vector.shape_cast %39 : vector<1x2x128xf32> to vector<2x128xf32>
    %41 = vector.shape_cast %37 : vector<2x128xf32> to vector<1x2x128xf32>
    tpu.vector_store %arg12[%38, %c0_20, %c0_21], %41 {strides = array<i32>} : memref<8x2x128xf32, #tpu.memory_space<vmem>>, vector<1x2x128xf32>,
    %c1_i32 = arith.constant 1 : i32
    %42 = arith.index_cast %c1_i32 : i32 to index
    %c0_22 = arith.constant 0 : index
    %c0_23 = arith.constant 0 : index
    %43 = vector.load %arg13[%42, %c0_22, %c0_23] : memref<8x2x512xf32, #tpu.memory_space<vmem>>, vector<1x2x512xf32>
    %44 = vector.shape_cast %43 : vector<1x2x512xf32> to vector<2x512xf32>
    %cst_24 = arith.constant dense<0.000000e+00> : vector<2x512xf32>
    %45 = tpu.matmul %37, %3, %cst_24 {dimension_numbers = #tpu.dot_dimension_numbers<[1], [0], [0], [1], [0, 0, 1, 1], [], []>} : vector<2x128xf32>, vector<128x512xf32>, vector<2x512xf32> -> vector<2x512xf32>
    %46 = arith.addf %44, %45 : vector<2x512xf32>
    %47 = vector.extract_strided_slice %46 {offsets = [0, 0], sizes = [2, 384], strides = [1, 1]} : vector<2x512xf32> to vector<2x384xf32>
    %48 = arith.negf %47 : vector<2x384xf32>
    %49 = math.exp %48 : vector<2x384xf32>
    %cst_25 = arith.constant 1.000000e+00 : f32
    %50 = vector.broadcast %cst_25 : f32 to vector<2x384xf32>
    %51 = arith.addf %50, %49 : vector<2x384xf32>
    %52 = arith.divf %50, %51 : vector<2x384xf32>
    %53 = vector.extract_strided_slice %46 {offsets = [0, 384], sizes = [2, 128], strides = [1, 1]} : vector<2x512xf32> to vector<2x128xf32>
    %54 = math.tanh %53 : vector<2x128xf32>
    %55 = vector.extract_strided_slice %52 {offsets = [0, 0], sizes = [2, 128], strides = [1, 1]} : vector<2x384xf32> to vector<2x128xf32>
    %56 = vector.extract_strided_slice %52 {offsets = [0, 128], sizes = [2, 128], strides = [1, 1]} : vector<2x384xf32> to vector<2x128xf32>
    %57 = vector.extract_strided_slice %52 {offsets = [0, 256], sizes = [2, 128], strides = [1, 1]} : vector<2x384xf32> to vector<2x128xf32>
    %58 = arith.mulf %56, %35 : vector<2x128xf32>
    %59 = arith.mulf %55, %54 : vector<2x128xf32>
    %60 = arith.addf %58, %59 : vector<2x128xf32>
    %61 = math.tanh %60 : vector<2x128xf32>
    %62 = arith.mulf %57, %61 : vector<2x128xf32>
    %63 = arith.index_cast %c1_i32 : i32 to index
    %c0_26 = arith.constant 0 : index
    %c0_27 = arith.constant 0 : index
    %64 = vector.load %arg12[%63, %c0_26, %c0_27] : memref<8x2x128xf32, #tpu.memory_space<vmem>>, vector<1x2x128xf32>
    %65 = vector.shape_cast %64 : vector<1x2x128xf32> to vector<2x128xf32>
    %66 = vector.shape_cast %62 : vector<2x128xf32> to vector<1x2x128xf32>
    tpu.vector_store %arg12[%63, %c0_26, %c0_27], %66 {strides = array<i32>} : memref<8x2x128xf32, #tpu.memory_space<vmem>>, vector<1x2x128xf32>,
    %c2_i32 = arith.constant 2 : i32
    %67 = arith.index_cast %c2_i32 : i32 to index
    %c0_28 = arith.constant 0 : index
    %c0_29 = arith.constant 0 : index
    %68 = vector.load %arg13[%67, %c0_28, %c0_29] : memref<8x2x512xf32, #tpu.memory_space<vmem>>, vector<1x2x512xf32>
    %69 = vector.shape_cast %68 : vector<1x2x512xf32> to vector<2x512xf32>
    %cst_30 = arith.constant dense<0.000000e+00> : vector<2x512xf32>
    %70 = tpu.matmul %62, %3, %cst_30 {dimension_numbers = #tpu.dot_dimension_numbers<[1], [0], [0], [1], [0, 0, 1, 1], [], []>} : vector<2x128xf32>, vector<128x512xf32>, vector<2x512xf32> -> vector<2x512xf32>
    %71 = arith.addf %69, %70 : vector<2x512xf32>
    %72 = vector.extract_strided_slice %71 {offsets = [0, 0], sizes = [2, 384], strides = [1, 1]} : vector<2x512xf32> to vector<2x384xf32>
    %73 = arith.negf %72 : vector<2x384xf32>
    %74 = math.exp %73 : vector<2x384xf32>
    %cst_31 = arith.constant 1.000000e+00 : f32
    %75 = vector.broadcast %cst_31 : f32 to vector<2x384xf32>
    %76 = arith.addf %75, %74 : vector<2x384xf32>
    %77 = arith.divf %75, %76 : vector<2x384xf32>
    %78 = vector.extract_strided_slice %71 {offsets = [0, 384], sizes = [2, 128], strides = [1, 1]} : vector<2x512xf32> to vector<2x128xf32>
    %79 = math.tanh %78 : vector<2x128xf32>
    %80 = vector.extract_strided_slice %77 {offsets = [0, 0], sizes = [2, 128], strides = [1, 1]} : vector<2x384xf32> to vector<2x128xf32>
    %81 = vector.extract_strided_slice %77 {offsets = [0, 128], sizes = [2, 128], strides = [1, 1]} : vector<2x384xf32> to vector<2x128xf32>
    %82 = vector.extract_strided_slice %77 {offsets = [0, 256], sizes = [2, 128], strides = [1, 1]} : vector<2x384xf32> to vector<2x128xf32>
    %83 = arith.mulf %81, %60 : vector<2x128xf32>
    %84 = arith.mulf %80, %79 : vector<2x128xf32>
    %85 = arith.addf %83, %84 : vector<2x128xf32>
    %86 = math.tanh %85 : vector<2x128xf32>
    %87 = arith.mulf %82, %86 : vector<2x128xf32>
    %88 = arith.index_cast %c2_i32 : i32 to index
    %c0_32 = arith.constant 0 : index
    %c0_33 = arith.constant 0 : index
    %89 = vector.load %arg12[%88, %c0_32, %c0_33] : memref<8x2x128xf32, #tpu.memory_space<vmem>>, vector<1x2x128xf32>
    %90 = vector.shape_cast %89 : vector<1x2x128xf32> to vector<2x128xf32>
    %91 = vector.shape_cast %87 : vector<2x128xf32> to vector<1x2x128xf32>
    tpu.vector_store %arg12[%88, %c0_32, %c0_33], %91 {strides = array<i32>} : memref<8x2x128xf32, #tpu.memory_space<vmem>>, vector<1x2x128xf32>,
    %c3_i32 = arith.constant 3 : i32
    %92 = arith.index_cast %c3_i32 : i32 to index
    %c0_34 = arith.constant 0 : index
    %c0_35 = arith.constant 0 : index
    %93 = vector.load %arg13[%92, %c0_34, %c0_35] : memref<8x2x512xf32, #tpu.memory_space<vmem>>, vector<1x2x512xf32>
    %94 = vector.shape_cast %93 : vector<1x2x512xf32> to vector<2x512xf32>
    %cst_36 = arith.constant dense<0.000000e+00> : vector<2x512xf32>
    %95 = tpu.matmul %87, %3, %cst_36 {dimension_numbers = #tpu.dot_dimension_numbers<[1], [0], [0], [1], [0, 0, 1, 1], [], []>} : vector<2x128xf32>, vector<128x512xf32>, vector<2x512xf32> -> vector<2x512xf32>
    %96 = arith.addf %94, %95 : vector<2x512xf32>
    %97 = vector.extract_strided_slice %96 {offsets = [0, 0], sizes = [2, 384], strides = [1, 1]} : vector<2x512xf32> to vector<2x384xf32>
    %98 = arith.negf %97 : vector<2x384xf32>
    %99 = math.exp %98 : vector<2x384xf32>
    %cst_37 = arith.constant 1.000000e+00 : f32
    %100 = vector.broadcast %cst_37 : f32 to vector<2x384xf32>
    %101 = arith.addf %100, %99 : vector<2x384xf32>
    %102 = arith.divf %100, %101 : vector<2x384xf32>
    %103 = vector.extract_strided_slice %96 {offsets = [0, 384], sizes = [2, 128], strides = [1, 1]} : vector<2x512xf32> to vector<2x128xf32>
    %104 = math.tanh %103 : vector<2x128xf32>
    %105 = vector.extract_strided_slice %102 {offsets = [0, 0], sizes = [2, 128], strides = [1, 1]} : vector<2x384xf32> to vector<2x128xf32>
    %106 = vector.extract_strided_slice %102 {offsets = [0, 128], sizes = [2, 128], strides = [1, 1]} : vector<2x384xf32> to vector<2x128xf32>
    %107 = vector.extract_strided_slice %102 {offsets = [0, 256], sizes = [2, 128], strides = [1, 1]} : vector<2x384xf32> to vector<2x128xf32>
    %108 = arith.mulf %106, %85 : vector<2x128xf32>
    %109 = arith.mulf %105, %104 : vector<2x128xf32>
    %110 = arith.addf %108, %109 : vector<2x128xf32>
    %111 = math.tanh %110 : vector<2x128xf32>
    %112 = arith.mulf %107, %111 : vector<2x128xf32>
    %113 = arith.index_cast %c3_i32 : i32 to index
    %c0_38 = arith.constant 0 : index
    %c0_39 = arith.constant 0 : index
    %114 = vector.load %arg12[%113, %c0_38, %c0_39] : memref<8x2x128xf32, #tpu.memory_space<vmem>>, vector<1x2x128xf32>
    %115 = vector.shape_cast %114 : vector<1x2x128xf32> to vector<2x128xf32>
    %116 = vector.shape_cast %112 : vector<2x128xf32> to vector<1x2x128xf32>
    tpu.vector_store %arg12[%113, %c0_38, %c0_39], %116 {strides = array<i32>} : memref<8x2x128xf32, #tpu.memory_space<vmem>>, vector<1x2x128xf32>,
    %c4_i32 = arith.constant 4 : i32
    %117 = arith.index_cast %c4_i32 : i32 to index
    %c0_40 = arith.constant 0 : index
    %c0_41 = arith.constant 0 : index
    %118 = vector.load %arg13[%117, %c0_40, %c0_41] : memref<8x2x512xf32, #tpu.memory_space<vmem>>, vector<1x2x512xf32>
    %119 = vector.shape_cast %118 : vector<1x2x512xf32> to vector<2x512xf32>
    %cst_42 = arith.constant dense<0.000000e+00> : vector<2x512xf32>
    %120 = tpu.matmul %112, %3, %cst_42 {dimension_numbers = #tpu.dot_dimension_numbers<[1], [0], [0], [1], [0, 0, 1, 1], [], []>} : vector<2x128xf32>, vector<128x512xf32>, vector<2x512xf32> -> vector<2x512xf32>
    %121 = arith.addf %119, %120 : vector<2x512xf32>
    %122 = vector.extract_strided_slice %121 {offsets = [0, 0], sizes = [2, 384], strides = [1, 1]} : vector<2x512xf32> to vector<2x384xf32>
    %123 = arith.negf %122 : vector<2x384xf32>
    %124 = math.exp %123 : vector<2x384xf32>
    %cst_43 = arith.constant 1.000000e+00 : f32
    %125 = vector.broadcast %cst_43 : f32 to vector<2x384xf32>
    %126 = arith.addf %125, %124 : vector<2x384xf32>
    %127 = arith.divf %125, %126 : vector<2x384xf32>
    %128 = vector.extract_strided_slice %121 {offsets = [0, 384], sizes = [2, 128], strides = [1, 1]} : vector<2x512xf32> to vector<2x128xf32>
    %129 = math.tanh %128 : vector<2x128xf32>
    %130 = vector.extract_strided_slice %127 {offsets = [0, 0], sizes = [2, 128], strides = [1, 1]} : vector<2x384xf32> to vector<2x128xf32>
    %131 = vector.extract_strided_slice %127 {offsets = [0, 128], sizes = [2, 128], strides = [1, 1]} : vector<2x384xf32> to vector<2x128xf32>
    %132 = vector.extract_strided_slice %127 {offsets = [0, 256], sizes = [2, 128], strides = [1, 1]} : vector<2x384xf32> to vector<2x128xf32>
    %133 = arith.mulf %131, %110 : vector<2x128xf32>
    %134 = arith.mulf %130, %129 : vector<2x128xf32>
    %135 = arith.addf %133, %134 : vector<2x128xf32>
    %136 = math.tanh %135 : vector<2x128xf32>
    %137 = arith.mulf %132, %136 : vector<2x128xf32>
    %138 = arith.index_cast %c4_i32 : i32 to index
    %c0_44 = arith.constant 0 : index
    %c0_45 = arith.constant 0 : index
    %139 = vector.load %arg12[%138, %c0_44, %c0_45] : memref<8x2x128xf32, #tpu.memory_space<vmem>>, vector<1x2x128xf32>
    %140 = vector.shape_cast %139 : vector<1x2x128xf32> to vector<2x128xf32>
    %141 = vector.shape_cast %137 : vector<2x128xf32> to vector<1x2x128xf32>
    tpu.vector_store %arg12[%138, %c0_44, %c0_45], %141 {strides = array<i32>} : memref<8x2x128xf32, #tpu.memory_space<vmem>>, vector<1x2x128xf32>,
    %c5_i32 = arith.constant 5 : i32
    %142 = arith.index_cast %c5_i32 : i32 to index
    %c0_46 = arith.constant 0 : index
    %c0_47 = arith.constant 0 : index
    %143 = vector.load %arg13[%142, %c0_46, %c0_47] : memref<8x2x512xf32, #tpu.memory_space<vmem>>, vector<1x2x512xf32>
    %144 = vector.shape_cast %143 : vector<1x2x512xf32> to vector<2x512xf32>
    %cst_48 = arith.constant dense<0.000000e+00> : vector<2x512xf32>
    %145 = tpu.matmul %137, %3, %cst_48 {dimension_numbers = #tpu.dot_dimension_numbers<[1], [0], [0], [1], [0, 0, 1, 1], [], []>} : vector<2x128xf32>, vector<128x512xf32>, vector<2x512xf32> -> vector<2x512xf32>
    %146 = arith.addf %144, %145 : vector<2x512xf32>
    %147 = vector.extract_strided_slice %146 {offsets = [0, 0], sizes = [2, 384], strides = [1, 1]} : vector<2x512xf32> to vector<2x384xf32>
    %148 = arith.negf %147 : vector<2x384xf32>
    %149 = math.exp %148 : vector<2x384xf32>
    %cst_49 = arith.constant 1.000000e+00 : f32
    %150 = vector.broadcast %cst_49 : f32 to vector<2x384xf32>
    %151 = arith.addf %150, %149 : vector<2x384xf32>
    %152 = arith.divf %150, %151 : vector<2x384xf32>
    %153 = vector.extract_strided_slice %146 {offsets = [0, 384], sizes = [2, 128], strides = [1, 1]} : vector<2x512xf32> to vector<2x128xf32>
    %154 = math.tanh %153 : vector<2x128xf32>
    %155 = vector.extract_strided_slice %152 {offsets = [0, 0], sizes = [2, 128], strides = [1, 1]} : vector<2x384xf32> to vector<2x128xf32>
    %156 = vector.extract_strided_slice %152 {offsets = [0, 128], sizes = [2, 128], strides = [1, 1]} : vector<2x384xf32> to vector<2x128xf32>
    %157 = vector.extract_strided_slice %152 {offsets = [0, 256], sizes = [2, 128], strides = [1, 1]} : vector<2x384xf32> to vector<2x128xf32>
    %158 = arith.mulf %156, %135 : vector<2x128xf32>
    %159 = arith.mulf %155, %154 : vector<2x128xf32>
    %160 = arith.addf %158, %159 : vector<2x128xf32>
    %161 = math.tanh %160 : vector<2x128xf32>
    %162 = arith.mulf %157, %161 : vector<2x128xf32>
    %163 = arith.index_cast %c5_i32 : i32 to index
    %c0_50 = arith.constant 0 : index
    %c0_51 = arith.constant 0 : index
    %164 = vector.load %arg12[%163, %c0_50, %c0_51] : memref<8x2x128xf32, #tpu.memory_space<vmem>>, vector<1x2x128xf32>
    %165 = vector.shape_cast %164 : vector<1x2x128xf32> to vector<2x128xf32>
    %166 = vector.shape_cast %162 : vector<2x128xf32> to vector<1x2x128xf32>
    tpu.vector_store %arg12[%163, %c0_50, %c0_51], %166 {strides = array<i32>} : memref<8x2x128xf32, #tpu.memory_space<vmem>>, vector<1x2x128xf32>,
    %c6_i32 = arith.constant 6 : i32
    %167 = arith.index_cast %c6_i32 : i32 to index
    %c0_52 = arith.constant 0 : index
    %c0_53 = arith.constant 0 : index
    %168 = vector.load %arg13[%167, %c0_52, %c0_53] : memref<8x2x512xf32, #tpu.memory_space<vmem>>, vector<1x2x512xf32>
    %169 = vector.shape_cast %168 : vector<1x2x512xf32> to vector<2x512xf32>
    %cst_54 = arith.constant dense<0.000000e+00> : vector<2x512xf32>
    %170 = tpu.matmul %162, %3, %cst_54 {dimension_numbers = #tpu.dot_dimension_numbers<[1], [0], [0], [1], [0, 0, 1, 1], [], []>} : vector<2x128xf32>, vector<128x512xf32>, vector<2x512xf32> -> vector<2x512xf32>
    %171 = arith.addf %169, %170 : vector<2x512xf32>
    %172 = vector.extract_strided_slice %171 {offsets = [0, 0], sizes = [2, 384], strides = [1, 1]} : vector<2x512xf32> to vector<2x384xf32>
    %173 = arith.negf %172 : vector<2x384xf32>
    %174 = math.exp %173 : vector<2x384xf32>
    %cst_55 = arith.constant 1.000000e+00 : f32
    %175 = vector.broadcast %cst_55 : f32 to vector<2x384xf32>
    %176 = arith.addf %175, %174 : vector<2x384xf32>
    %177 = arith.divf %175, %176 : vector<2x384xf32>
    %178 = vector.extract_strided_slice %171 {offsets = [0, 384], sizes = [2, 128], strides = [1, 1]} : vector<2x512xf32> to vector<2x128xf32>
    %179 = math.tanh %178 : vector<2x128xf32>
    %180 = vector.extract_strided_slice %177 {offsets = [0, 0], sizes = [2, 128], strides = [1, 1]} : vector<2x384xf32> to vector<2x128xf32>
    %181 = vector.extract_strided_slice %177 {offsets = [0, 128], sizes = [2, 128], strides = [1, 1]} : vector<2x384xf32> to vector<2x128xf32>
    %182 = vector.extract_strided_slice %177 {offsets = [0, 256], sizes = [2, 128], strides = [1, 1]} : vector<2x384xf32> to vector<2x128xf32>
    %183 = arith.mulf %181, %160 : vector<2x128xf32>
    %184 = arith.mulf %180, %179 : vector<2x128xf32>
    %185 = arith.addf %183, %184 : vector<2x128xf32>
    %186 = math.tanh %185 : vector<2x128xf32>
    %187 = arith.mulf %182, %186 : vector<2x128xf32>
    %188 = arith.index_cast %c6_i32 : i32 to index
    %c0_56 = arith.constant 0 : index
    %c0_57 = arith.constant 0 : index
    %189 = vector.load %arg12[%188, %c0_56, %c0_57] : memref<8x2x128xf32, #tpu.memory_space<vmem>>, vector<1x2x128xf32>
    %190 = vector.shape_cast %189 : vector<1x2x128xf32> to vector<2x128xf32>
    %191 = vector.shape_cast %187 : vector<2x128xf32> to vector<1x2x128xf32>
    tpu.vector_store %arg12[%188, %c0_56, %c0_57], %191 {strides = array<i32>} : memref<8x2x128xf32, #tpu.memory_space<vmem>>, vector<1x2x128xf32>,
    %c7_i32 = arith.constant 7 : i32
    %192 = arith.index_cast %c7_i32 : i32 to index
    %c0_58 = arith.constant 0 : index
    %c0_59 = arith.constant 0 : index
    %193 = vector.load %arg13[%192, %c0_58, %c0_59] : memref<8x2x512xf32, #tpu.memory_space<vmem>>, vector<1x2x512xf32>
    %194 = vector.shape_cast %193 : vector<1x2x512xf32> to vector<2x512xf32>
    %cst_60 = arith.constant dense<0.000000e+00> : vector<2x512xf32>
    %195 = tpu.matmul %187, %3, %cst_60 {dimension_numbers = #tpu.dot_dimension_numbers<[1], [0], [0], [1], [0, 0, 1, 1], [], []>} : vector<2x128xf32>, vector<128x512xf32>, vector<2x512xf32> -> vector<2x512xf32>
    %196 = arith.addf %194, %195 : vector<2x512xf32>
    %197 = vector.extract_strided_slice %196 {offsets = [0, 0], sizes = [2, 384], strides = [1, 1]} : vector<2x512xf32> to vector<2x384xf32>
    %198 = arith.negf %197 : vector<2x384xf32>
    %199 = math.exp %198 : vector<2x384xf32>
    %cst_61 = arith.constant 1.000000e+00 : f32
    %200 = vector.broadcast %cst_61 : f32 to vector<2x384xf32>
    %201 = arith.addf %200, %199 : vector<2x384xf32>
    %202 = arith.divf %200, %201 : vector<2x384xf32>
    %203 = vector.extract_strided_slice %196 {offsets = [0, 384], sizes = [2, 128], strides = [1, 1]} : vector<2x512xf32> to vector<2x128xf32>
    %204 = math.tanh %203 : vector<2x128xf32>
    %205 = vector.extract_strided_slice %202 {offsets = [0, 0], sizes = [2, 128], strides = [1, 1]} : vector<2x384xf32> to vector<2x128xf32>
    %206 = vector.extract_strided_slice %202 {offsets = [0, 128], sizes = [2, 128], strides = [1, 1]} : vector<2x384xf32> to vector<2x128xf32>
    %207 = vector.extract_strided_slice %202 {offsets = [0, 256], sizes = [2, 128], strides = [1, 1]} : vector<2x384xf32> to vector<2x128xf32>
    %208 = arith.mulf %206, %185 : vector<2x128xf32>
    %209 = arith.mulf %205, %204 : vector<2x128xf32>
    %210 = arith.addf %208, %209 : vector<2x128xf32>
    %211 = math.tanh %210 : vector<2x128xf32>
    %212 = arith.mulf %207, %211 : vector<2x128xf32>
    %213 = arith.index_cast %c7_i32 : i32 to index
    %c0_62 = arith.constant 0 : index
    %c0_63 = arith.constant 0 : index
    %214 = vector.load %arg12[%213, %c0_62, %c0_63] : memref<8x2x128xf32, #tpu.memory_space<vmem>>, vector<1x2x128xf32>
    %215 = vector.shape_cast %214 : vector<1x2x128xf32> to vector<2x128xf32>
    %216 = vector.shape_cast %212 : vector<2x128xf32> to vector<1x2x128xf32>
    tpu.vector_store %arg12[%213, %c0_62, %c0_63], %216 {strides = array<i32>} : memref<8x2x128xf32, #tpu.memory_space<vmem>>, vector<1x2x128xf32>,
    %c8_i32 = arith.constant 8 : i32
    %c0_64 = arith.constant 0 : index
    %c0_65 = arith.constant 0 : index
    %217 = vector.load %arg10[%c0_64, %c0_65] : memref<2x128xf32, #tpu.memory_space<vmem>>, vector<2x128xf32>
    tpu.vector_store %arg10[%c0_64, %c0_65], %212 {strides = array<i32>} : memref<2x128xf32, #tpu.memory_space<vmem>>, vector<2x128xf32>,
    %c0_66 = arith.constant 0 : index
    %c0_67 = arith.constant 0 : index
    %218 = vector.load %arg11[%c0_66, %c0_67] : memref<2x128xf32, #tpu.memory_space<vmem>>, vector<2x128xf32>
    tpu.vector_store %arg11[%c0_66, %c0_67], %210 {strides = array<i32>} : memref<2x128xf32, #tpu.memory_space<vmem>>, vector<2x128xf32>,
    %c0_68 = arith.constant 0 : index
    %c0_69 = arith.constant 0 : index
    %c0_70 = arith.constant 0 : index
    %219 = vector.load %arg12[%c0_68, %c0_69, %c0_70] : memref<8x2x128xf32, #tpu.memory_space<vmem>>, vector<8x2x128xf32>
    %c0_71 = arith.constant 0 : index
    %c0_72 = arith.constant 0 : index
    %c0_73 = arith.constant 0 : index
    %220 = vector.load %arg6[%c0_71, %c0_72, %c0_73] : memref<1x1x128xf32, #tpu.memory_space<vmem>>, vector<1x1x128xf32>
    %221 = vector.broadcast %220 : vector<1x1x128xf32> to vector<8x2x128xf32>
    %222 = arith.mulf %219, %221 : vector<8x2x128xf32>
    %cst_74 = arith.constant dense<0.000000e+00> : vector<8x2xf32>
    %223 = vector.multi_reduction <add>, %222, %cst_74 [2] : vector<8x2x128xf32> to vector<8x2xf32>
    %c0_75 = arith.constant 0 : index
    %c0_76 = arith.constant 0 : index
    %c0_77 = arith.constant 0 : index
    %224 = vector.load %arg2[%c0_75, %c0_76, %c0_77] : memref<2x4x8xf32, #tpu.memory_space<vmem>>, vector<2x4x8xf32>
    %c0_78 = arith.constant 0 : index
    %c0_79 = arith.constant 0 : index
    %c0_80 = arith.constant 0 : index
    %225 = vector.load %arg7[%c0_78, %c0_79, %c0_80] : memref<1x4x1xf32, #tpu.memory_space<vmem>>, vector<1x4x1xf32>
    %226 = vector.broadcast %225 : vector<1x4x1xf32> to vector<2x4x8xf32>
    %227 = arith.mulf %224, %226 : vector<2x4x8xf32>
    %cst_81 = arith.constant dense<0.000000e+00> : vector<2x8xf32>
    %228 = vector.multi_reduction <add>, %227, %cst_81 [1] : vector<2x4x8xf32> to vector<2x8xf32>
    %229 = tpu.transpose %223, [1, 0] : vector<8x2xf32> -> vector<2x8xf32>
    %230 = arith.addf %229, %228 : vector<2x8xf32>
    %c0_82 = arith.constant 0 : index
    %c0_83 = arith.constant 0 : index
    %231 = vector.load %arg8[%c0_82, %c0_83] : memref<1x1xf32, #tpu.memory_space<vmem>>, vector<1x1xf32>
    %232 = vector.broadcast %231 : vector<1x1xf32> to vector<2x8xf32>
    %233 = arith.addf %230, %232 : vector<2x8xf32>
    %c0_84 = arith.constant 0 : index
    %c0_85 = arith.constant 0 : index
    %234 = vector.load %arg9[%c0_84, %c0_85] : memref<2x8xf32, #tpu.memory_space<vmem>>, vector<2x8xf32>
    tpu.vector_store %arg9[%c0_84, %c0_85], %233 {strides = array<i32>} : memref<2x8xf32, #tpu.memory_space<vmem>>, vector<2x8xf32>,
    return
  }
  func.func @transform_0(%arg0: i32) -> (i32, i32, i32) {
    %c0_i32 = arith.constant 0 : i32
    %c0_i32_0 = arith.constant 0 : i32
    %c0_i32_1 = arith.constant 0 : i32
    return %arg0, %c0_i32, %c0_i32_0 : i32, i32, i32
  }
  func.func @transform_1(%arg0: i32) -> (i32, i32, i32) {
    %c0_i32 = arith.constant 0 : i32
    %c0_i32_0 = arith.constant 0 : i32
    %c0_i32_1 = arith.constant 0 : i32
    return %c0_i32, %c0_i32_0, %arg0 : i32, i32, i32
  }
  func.func @transform_2(%arg0: i32) -> (i32, i32) {
    %c0_i32 = arith.constant 0 : i32
    %c0_i32_0 = arith.constant 0 : i32
    %c0_i32_1 = arith.constant 0 : i32
    return %c0_i32, %c0_i32_0 : i32, i32
  }
  func.func @transform_3(%arg0: i32) -> (i32, i32) {
    %c0_i32 = arith.constant 0 : i32
    %c0_i32_0 = arith.constant 0 : i32
    %c0_i32_1 = arith.constant 0 : i32
    return %c0_i32, %c0_i32_0 : i32, i32
  }
  func.func @transform_4(%arg0: i32) -> (i32, i32) {
    %c0_i32 = arith.constant 0 : i32
    %c0_i32_0 = arith.constant 0 : i32
    %c0_i32_1 = arith.constant 0 : i32
    return %c0_i32, %c0_i32_0 : i32, i32
  }
  func.func @transform_5(%arg0: i32) -> (i32, i32, i32) {
    %c0_i32 = arith.constant 0 : i32
    %c0_i32_0 = arith.constant 0 : i32
    %c0_i32_1 = arith.constant 0 : i32
    %c0_i32_2 = arith.constant 0 : i32
    return %c0_i32, %c0_i32_0, %c0_i32_1 : i32, i32, i32
  }
  func.func @transform_6(%arg0: i32) -> (i32, i32, i32) {
    %c0_i32 = arith.constant 0 : i32
    %c0_i32_0 = arith.constant 0 : i32
    %c0_i32_1 = arith.constant 0 : i32
    %c0_i32_2 = arith.constant 0 : i32
    return %c0_i32, %c0_i32_0, %c0_i32_1 : i32, i32, i32
  }
  func.func @transform_7(%arg0: i32) -> (i32, i32) {
    %c0_i32 = arith.constant 0 : i32
    %c0_i32_0 = arith.constant 0 : i32
    %c0_i32_1 = arith.constant 0 : i32
    return %c0_i32, %c0_i32_0 : i32, i32
  }
  func.func @transform_8(%arg0: i32) -> (i32, i32) {
    %c0_i32 = arith.constant 0 : i32
    %c0_i32_0 = arith.constant 0 : i32
    return %c0_i32, %arg0 : i32, i32
  }
}

</mosaic_0001>

<llo_original>
// kernel: super_music_model_pallas.1
$region0: #{super_music_model_pallas.1}
  #allocation0 [shape = 'u32[]', space=smem, size = 0x4, offset = 0x4, fixed_abs, tag = 'smem constant byte address 0x4 - core index']
  #allocation1 [shape = 'u32[144,128]{1,0:T(1,128)}', space=vmem, size = 0x12000, scoped, tag = 'internal scratch']
  #allocation2 [shape = 'f32[2,128]{1,0:T(2,128)}', space=vmem, size = 0x400, scoped, tag = 'scratch operand']
  #allocation3 [shape = 'f32[2,128]{1,0:T(2,128)}', space=vmem, size = 0x400, scoped, tag = 'scratch operand']
  #allocation4 [shape = 'f32[8,2,128]{2,1,0:T(2,128)}', space=vmem, size = 0x2000, scoped, tag = 'scratch operand']
  #allocation5 [shape = 'f32[8,2,512]{2,1,0:T(2,128)}', space=vmem, size = 0x8000, scoped, tag = 'scratch operand']
  #allocation6 [shape = 'f32[1,1]{1,0:T(1,128)S(1)}', space=vmem, size = 0x200, scoped, tag = 'scoped memory for super_music_model_pallas.1']
  %s0 = inlined_call_operand.vmem [shape: f32[8,2,1], index: 0, kind: input, shape index: {}]
  %s1 = inlined_call_operand.vmem [shape: f32[2,4,8], index: 1, kind: input, shape index: {}]
  %s2 = inlined_call_operand.vmem [shape: f32[1,512], index: 2, kind: input, shape index: {}]
  %s3 = inlined_call_operand.vmem [shape: f32[128,512], index: 3, kind: input, shape index: {}]
  %s4 = inlined_call_operand.vmem [shape: f32[1,512], index: 4, kind: input, shape index: {}]
  %s5 = inlined_call_operand.vmem [shape: f32[1,1,128], index: 5, kind: input, shape index: {}]
  %s6 = inlined_call_operand.vmem [shape: f32[1,4,1], index: 6, kind: input, shape index: {}]
  %s7 = inlined_call_operand.<no memory space> [shape: f32[1,1], index: 7, kind: input, shape index: {}]
  %s8 = inlined_call_operand.hbm [shape: f32[2,8], index: 8, kind: output, shape index: {}]
  %s9 = sld [smem:[#allocation0]]
  $region46: #{super_music_model_pallas.1} parent=0
    _
  %s11 = ssub.s32 1, %s9
  %s12 = scalar_select 0, %s11, %s9
  %v13 = vstv %s7
  %14 = vst [vmem:[#allocation6] sm:$0x1] %v13
  $region1: #{super_music_model_pallas.1} parent=0
    #allocation7 [shape = 'u8[1024]{0}', space=vmem, size = 0x400, scoped, tag = 'output window, operand 0, single buffered']
    #allocation8 [shape = 's32[1]{0}', space=sflag, size = 0x4, scoped, tag = 'scoped memory for super_music_model_pallas.1']
    %15 = vsyncpa [#allocation8], 0
    // Predicated region
    $region2: #{super_music_model_pallas.1} parent=1 // pred_check
      _
    $region3: #{super_music_model_pallas.1} parent=1 // pred_check_branch
      %17 = sbr.rel (0) target = $region5
    $region4: #{super_music_model_pallas.1} parent=1 // pred_region
      _
    $region5: #{super_music_model_pallas.1} parent=1 // pred_fallthru
      _
    // Predicated region
    $region6: #{super_music_model_pallas.1} parent=1 // pred_check
      _
    $region7: #{super_music_model_pallas.1} parent=1 // pred_check_branch
      %19 = sbr.rel (0) target = $region9
    $region8: #{super_music_model_pallas.1} parent=1 // pred_region
      _
    $region9: #{super_music_model_pallas.1} parent=1 // pred_fallthru
      _
    // Predicated region
    $region10: #{super_music_model_pallas.1} parent=1 // pred_check
      _
    $region11: #{super_music_model_pallas.1} parent=1 // pred_check_branch
      %21 = sbr.rel (0) target = $region13
    $region12: #{super_music_model_pallas.1} parent=1 // pred_region
      _
    $region13: #{super_music_model_pallas.1} parent=1 // pred_fallthru
      _
    // Predicated region
    $region14: #{super_music_model_pallas.1} parent=1 // pred_check
      _
    $region15: #{super_music_model_pallas.1} parent=1 // pred_check_branch
      %23 = sbr.rel (0) target = $region17
    $region16: #{super_music_model_pallas.1} parent=1 // pred_region
      _
    $region17: #{super_music_model_pallas.1} parent=1 // pred_fallthru
      _
    // Predicated region
    $region18: #{super_music_model_pallas.1} parent=1 // pred_check
      _
    $region19: #{super_music_model_pallas.1} parent=1 // pred_check_branch
      %25 = sbr.rel (0) target = $region21
    $region20: #{super_music_model_pallas.1} parent=1 // pred_region
      _
    $region21: #{super_music_model_pallas.1} parent=1 // pred_fallthru
      _
    // Predicated region
    $region22: #{super_music_model_pallas.1} parent=1 // pred_check
      _
    $region23: #{super_music_model_pallas.1} parent=1 // pred_check_branch
      %27 = sbr.rel (0) target = $region25
    $region24: #{super_music_model_pallas.1} parent=1 // pred_region
      _
    $region25: #{super_music_model_pallas.1} parent=1 // pred_fallthru
      _
    // Predicated region
    $region26: #{super_music_model_pallas.1} parent=1 // pred_check
      _
    $region27: #{super_music_model_pallas.1} parent=1 // pred_check_branch
      %29 = sbr.rel (0) target = $region29
    $region28: #{super_music_model_pallas.1} parent=1 // pred_region
      _
    $region29: #{super_music_model_pallas.1} parent=1 // pred_fallthru
      _
    // Predicated region
    $region30: #{super_music_model_pallas.1} parent=1 // pred_check
      _
    $region31: #{super_music_model_pallas.1} parent=1 // pred_check_branch
      %31 = sbr.rel (0) target = $region33
    $region32: #{super_music_model_pallas.1} parent=1 // pred_region
      _
    $region33: #{super_music_model_pallas.1} parent=1 // pred_fallthru
      _
    %p32 = scmp.eq.s32.totalorder 0, 0
    // Predicated region
    $region34: #{super_music_model_pallas.1} parent=1 // pred_check
      %p33 = pneg %p32
    $region35: #{super_music_model_pallas.1} parent=1 // pred_check_branch
      %35 = sbr.rel (%p33) target = $region37
    $region36: #{super_music_model_pallas.1} parent=1 // pred_region
      %36 = vst [vmem:[#allocation2] sm:$0x3] 0.0
      %37 = vst [vmem:[#allocation3] sm:$0x3] 0.0
    $region37: #{super_music_model_pallas.1} parent=1 // pred_fallthru
      _
    %v38 = vld [vmem:[%s3] sm:$0xff]
    %v39 = vld [vmem:[%s3 + $0x8] sm:$0xff]
    %v40 = vld [vmem:[%s3 + $0x10] sm:$0xff]
    %v41 = vld [vmem:[%s3 + $0x18] sm:$0xff]
    %v42 = vld [vmem:[%s3 + $0x20] sm:$0xff]
    %v43 = vld [vmem:[%s3 + $0x28] sm:$0xff]
    %v44 = vld [vmem:[%s3 + $0x30] sm:$0xff]
    %v45 = vld [vmem:[%s3 + $0x38] sm:$0xff]
    %v46 = vld [vmem:[%s3 + $0x40] sm:$0xff]
    %v47 = vld [vmem:[%s3 + $0x48] sm:$0xff]
    %v48 = vld [vmem:[%s3 + $0x50] sm:$0xff]
    %v49 = vld [vmem:[%s3 + $0x58] sm:$0xff]
    %v50 = vld [vmem:[%s3 + $0x60] sm:$0xff]
    %v51 = vld [vmem:[%s3 + $0x68] sm:$0xff]
    %v52 = vld [vmem:[%s3 + $0x70] sm:$0xff]
    %v53 = vld [vmem:[%s3 + $0x78] sm:$0xff]
    %v54 = vld [vmem:[%s3 + $0x80] sm:$0xff]
    %v55 = vld [vmem:[%s3 + $0x88] sm:$0xff]
    %v56 = vld [vmem:[%s3 + $0x90] sm:$0xff]
    %v57 = vld [vmem:[%s3 + $0x98] sm:$0xff]
    %v58 = vld [vmem:[%s3 + $0xa0] sm:$0xff]
    %v59 = vld [vmem:[%s3 + $0xa8] sm:$0xff]
    %v60 = vld [vmem:[%s3 + $0xb0] sm:$0xff]
    %v61 = vld [vmem:[%s3 + $0xb8] sm:$0xff]
    %v62 = vld [vmem:[%s3 + $0xc0] sm:$0xff]
    %v63 = vld [vmem:[%s3 + $0xc8] sm:$0xff]
    %v64 = vld [vmem:[%s3 + $0xd0] sm:$0xff]
    %v65 = vld [vmem:[%s3 + $0xd8] sm:$0xff]
    %v66 = vld [vmem:[%s3 + $0xe0] sm:$0xff]
    %v67 = vld [vmem:[%s3 + $0xe8] sm:$0xff]
    %v68 = vld [vmem:[%s3 + $0xf0] sm:$0xff]
    %v69 = vld [vmem:[%s3 + $0xf8] sm:$0xff]
    %v70 = vld [vmem:[%s3 + $0x100] sm:$0xff]
    %v71 = vld [vmem:[%s3 + $0x108] sm:$0xff]
    %v72 = vld [vmem:[%s3 + $0x110] sm:$0xff]
    %v73 = vld [vmem:[%s3 + $0x118] sm:$0xff]
    %v74 = vld [vmem:[%s3 + $0x120] sm:$0xff]
    %v75 = vld [vmem:[%s3 + $0x128] sm:$0xff]
    %v76 = vld [vmem:[%s3 + $0x130] sm:$0xff]
    %v77 = vld [vmem:[%s3 + $0x138] sm:$0xff]
    %v78 = vld [vmem:[%s3 + $0x140] sm:$0xff]
    %v79 = vld [vmem:[%s3 + $0x148] sm:$0xff]
    %v80 = vld [vmem:[%s3 + $0x150] sm:$0xff]
    %v81 = vld [vmem:[%s3 + $0x158] sm:$0xff]
    %v82 = vld [vmem:[%s3 + $0x160] sm:$0xff]
    %v83 = vld [vmem:[%s3 + $0x168] sm:$0xff]
    %v84 = vld [vmem:[%s3 + $0x170] sm:$0xff]
    %v85 = vld [vmem:[%s3 + $0x178] sm:$0xff]
    %v86 = vld [vmem:[%s3 + $0x180] sm:$0xff]
    %v87 = vld [vmem:[%s3 + $0x188] sm:$0xff]
    %v88 = vld [vmem:[%s3 + $0x190] sm:$0xff]
    %v89 = vld [vmem:[%s3 + $0x198] sm:$0xff]
    %v90 = vld [vmem:[%s3 + $0x1a0] sm:$0xff]
    %v91 = vld [vmem:[%s3 + $0x1a8] sm:$0xff]
    %v92 = vld [vmem:[%s3 + $0x1b0] sm:$0xff]
    %v93 = vld [vmem:[%s3 + $0x1b8] sm:$0xff]
    %v94 = vld [vmem:[%s3 + $0x1c0] sm:$0xff]
    %v95 = vld [vmem:[%s3 + $0x1c8] sm:$0xff]
    %v96 = vld [vmem:[%s3 + $0x1d0] sm:$0xff]
    %v97 = vld [vmem:[%s3 + $0x1d8] sm:$0xff]
    %v98 = vld [vmem:[%s3 + $0x1e0] sm:$0xff]
    %v99 = vld [vmem:[%s3 + $0x1e8] sm:$0xff]
    %v100 = vld [vmem:[%s3 + $0x1f0] sm:$0xff]
    %v101 = vld [vmem:[%s3 + $0x1f8] sm:$0xff]
    %v102 = vld [vmem:[%s0] sm:$0x3]
    %v103 = vld [vmem:[%s0 + $0x2] sm:$0x3]
    %v104 = vld [vmem:[%s0 + $0x4] sm:$0x3]
    %v105 = vld [vmem:[%s0 + $0x6] sm:$0x3]
    %v106 = vld [vmem:[%s0 + $0x8] sm:$0x3]
    %v107 = vld [vmem:[%s0 + $0xa] sm:$0x3]
    %v108 = vld [vmem:[%s0 + $0xc] sm:$0x3]
    %v109 = vld [vmem:[%s0 + $0xe] sm:$0x3]
    %v110 = vld [vmem:[%s2] sm:$0xf]
    %112 = vset.pattern.permute.xlu0 0
    %113 = vperm.xlu0 %112, %v102
    %v114 = vpop.permute.xlu0 %113
    %117 = vset.pattern.permute.xlu0 0
    %118 = vperm.xlu0 %117, %v103
    %v119 = vpop.permute.xlu0 %118
    %122 = vset.pattern.permute.xlu0 0
    %123 = vperm.xlu0 %122, %v104
    %v124 = vpop.permute.xlu0 %123
    %127 = vset.pattern.permute.xlu0 0
    %128 = vperm.xlu0 %127, %v105
    %v129 = vpop.permute.xlu0 %128
    %132 = vset.pattern.permute.xlu0 0
    %133 = vperm.xlu0 %132, %v106
    %v134 = vpop.permute.xlu0 %133
    %137 = vset.pattern.permute.xlu0 0
    %138 = vperm.xlu0 %137, %v107
    %v139 = vpop.permute.xlu0 %138
    %142 = vset.pattern.permute.xlu0 0
    %143 = vperm.xlu0 %142, %v108
    %v144 = vpop.permute.xlu0 %143
    %147 = vset.pattern.permute.xlu0 0
    %148 = vperm.xlu0 %147, %v109
    %v149 = vpop.permute.xlu0 %148
    %v152 = vlaneseq
    %v153 = vshrl.u32 %v152, 7
    %v154 = vsub.s32 0, %v153
    %v155 = vrot.slane %v110, %v154
    %v156 = vlaneseq
    %v157 = vshrl.u32 %v156, 7
    %v158 = vsub.s32 1, %v157
    %v159 = vrot.slane %v110, %v158
    %v160 = vlaneseq
    %v161 = vshrl.u32 %v160, 7
    %v162 = vsub.s32 2, %v161
    %v163 = vrot.slane %v110, %v162
    %v164 = vlaneseq
    %v165 = vshrl.u32 %v164, 7
    %v166 = vsub.s32 3, %v165
    %v167 = vrot.slane %v110, %v166
    %v172 = vmul.f32 %v114, %v155
    %v173 = vmul.f32 %v114, %v159
    %v174 = vmul.f32 %v114, %v163
    %v175 = vmul.f32 %v114, %v167
    %v176 = vmul.f32 %v119, %v155
    %v177 = vmul.f32 %v119, %v159
    %v178 = vmul.f32 %v119, %v163
    %v179 = vmul.f32 %v119, %v167
    %v180 = vmul.f32 %v124, %v155
    %v181 = vmul.f32 %v124, %v159
    %v182 = vmul.f32 %v124, %v163
    %v183 = vmul.f32 %v124, %v167
    %v184 = vmul.f32 %v129, %v155
    %v185 = vmul.f32 %v129, %v159
    %v186 = vmul.f32 %v129, %v163
    %v187 = vmul.f32 %v129, %v167
    %v188 = vmul.f32 %v134, %v155
    %v189 = vmul.f32 %v134, %v159
    %v190 = vmul.f32 %v134, %v163
    %v191 = vmul.f32 %v134, %v167
    %v192 = vmul.f32 %v139, %v155
    %v193 = vmul.f32 %v139, %v159
    %v194 = vmul.f32 %v139, %v163
    %v195 = vmul.f32 %v139, %v167
    %v196 = vmul.f32 %v144, %v155
    %v197 = vmul.f32 %v144, %v159
    %v198 = vmul.f32 %v144, %v163
    %v199 = vmul.f32 %v144, %v167
    %v200 = vmul.f32 %v149, %v155
    %v201 = vmul.f32 %v149, %v159
    %v202 = vmul.f32 %v149, %v163
    %v203 = vmul.f32 %v149, %v167
    %v204 = vld [vmem:[%s4] sm:$0xf]
    %v206 = vlaneseq
    %v207 = vshrl.u32 %v206, 7
    %v208 = vsub.s32 0, %v207
    %v209 = vrot.slane %v204, %v208
    %v210 = vlaneseq
    %v211 = vshrl.u32 %v210, 7
    %v212 = vsub.s32 1, %v211
    %v213 = vrot.slane %v204, %v212
    %v214 = vlaneseq
    %v215 = vshrl.u32 %v214, 7
    %v216 = vsub.s32 2, %v215
    %v217 = vrot.slane %v204, %v216
    %v218 = vlaneseq
    %v219 = vshrl.u32 %v218, 7
    %v220 = vsub.s32 3, %v219
    %v221 = vrot.slane %v204, %v220
    %v226 = vadd.f32 %v172, %v209
    %v227 = vadd.f32 %v173, %v213
    %v228 = vadd.f32 %v174, %v217
    %v229 = vadd.f32 %v175, %v221
    %v230 = vadd.f32 %v176, %v209
    %v231 = vadd.f32 %v177, %v213
    %v232 = vadd.f32 %v178, %v217
    %v233 = vadd.f32 %v179, %v221
    %v234 = vadd.f32 %v180, %v209
    %v235 = vadd.f32 %v181, %v213
    %v236 = vadd.f32 %v182, %v217
    %v237 = vadd.f32 %v183, %v221
    %v238 = vadd.f32 %v184, %v209
    %v239 = vadd.f32 %v185, %v213
    %v240 = vadd.f32 %v186, %v217
    %v241 = vadd.f32 %v187, %v221
    %v242 = vadd.f32 %v188, %v209
    %v243 = vadd.f32 %v189, %v213
    %v244 = vadd.f32 %v190, %v217
    %v245 = vadd.f32 %v191, %v221
    %v246 = vadd.f32 %v192, %v209
    %v247 = vadd.f32 %v193, %v213
    %v248 = vadd.f32 %v194, %v217
    %v249 = vadd.f32 %v195, %v221
    %v250 = vadd.f32 %v196, %v209
    %v251 = vadd.f32 %v197, %v213
    %v252 = vadd.f32 %v198, %v217
    %v253 = vadd.f32 %v199, %v221
    %v254 = vadd.f32 %v200, %v209
    %v255 = vadd.f32 %v201, %v213
    %v256 = vadd.f32 %v202, %v217
    %v257 = vadd.f32 %v203, %v221
    %v290 = vcombine.low %v226, %v227
    %v291 = vcombine.low %v228, %v229
    %v293 = vunpack.c.l.s4 1983009808
    %v294 = vunpack.c.0.s8 %v293
    %v295 = vlaneseq
    %v296 = vshrl.u32 %v295, 7
    %v297 = vsub.s32 %v294, %v296
    %v298 = vrot.slane %v290, %v297
    %v300 = vunpack.c.l.s4 1983009808
    %v301 = vunpack.c.0.s8 %v300
    %v302 = vlaneseq
    %v303 = vshrl.u32 %v302, 7
    %v304 = vsub.s32 %v301, %v303
    %v305 = vrot.slane %v291, %v304
    %v306 = vcombine.low %v298, %v305
    %v307 = vcombine.low %v230, %v231
    %v308 = vcombine.low %v232, %v233
    %v310 = vunpack.c.l.s4 1983009808
    %v311 = vunpack.c.0.s8 %v310
    %v312 = vlaneseq
    %v313 = vshrl.u32 %v312, 7
    %v314 = vsub.s32 %v311, %v313
    %v315 = vrot.slane %v307, %v314
    %v317 = vunpack.c.l.s4 1983009808
    %v318 = vunpack.c.0.s8 %v317
    %v319 = vlaneseq
    %v320 = vshrl.u32 %v319, 7
    %v321 = vsub.s32 %v318, %v320
    %v322 = vrot.slane %v308, %v321
    %v323 = vcombine.low %v315, %v322
    %v324 = vcombine.low %v234, %v235
    %v325 = vcombine.low %v236, %v237
    %v327 = vunpack.c.l.s4 1983009808
    %v328 = vunpack.c.0.s8 %v327
    %v329 = vlaneseq
    %v330 = vshrl.u32 %v329, 7
    %v331 = vsub.s32 %v328, %v330
    %v332 = vrot.slane %v324, %v331
    %v334 = vunpack.c.l.s4 1983009808
    %v335 = vunpack.c.0.s8 %v334
    %v336 = vlaneseq
    %v337 = vshrl.u32 %v336, 7
    %v338 = vsub.s32 %v335, %v337
    %v339 = vrot.slane %v325, %v338
    %v340 = vcombine.low %v332, %v339
    %v341 = vcombine.low %v238, %v239
    %v342 = vcombine.low %v240, %v241
    %v344 = vunpack.c.l.s4 1983009808
    %v345 = vunpack.c.0.s8 %v344
    %v346 = vlaneseq
    %v347 = vshrl.u32 %v346, 7
    %v348 = vsub.s32 %v345, %v347
    %v349 = vrot.slane %v341, %v348
    %v351 = vunpack.c.l.s4 1983009808
    %v352 = vunpack.c.0.s8 %v351
    %v353 = vlaneseq
    %v354 = vshrl.u32 %v353, 7
    %v355 = vsub.s32 %v352, %v354
    %v356 = vrot.slane %v342, %v355
    %v357 = vcombine.low %v349, %v356
    %v358 = vcombine.low %v242, %v243
    %v359 = vcombine.low %v244, %v245
    %v361 = vunpack.c.l.s4 1983009808
    %v362 = vunpack.c.0.s8 %v361
    %v363 = vlaneseq
    %v364 = vshrl.u32 %v363, 7
    %v365 = vsub.s32 %v362, %v364
    %v366 = vrot.slane %v358, %v365
    %v368 = vunpack.c.l.s4 1983009808
    %v369 = vunpack.c.0.s8 %v368
    %v370 = vlaneseq
    %v371 = vshrl.u32 %v370, 7
    %v372 = vsub.s32 %v369, %v371
    %v373 = vrot.slane %v359, %v372
    %v374 = vcombine.low %v366, %v373
    %v375 = vcombine.low %v246, %v247
    %v376 = vcombine.low %v248, %v249
    %v378 = vunpack.c.l.s4 1983009808
    %v379 = vunpack.c.0.s8 %v378
    %v380 = vlaneseq
    %v381 = vshrl.u32 %v380, 7
    %v382 = vsub.s32 %v379, %v381
    %v383 = vrot.slane %v375, %v382
    %v385 = vunpack.c.l.s4 1983009808
    %v386 = vunpack.c.0.s8 %v385
    %v387 = vlaneseq
    %v388 = vshrl.u32 %v387, 7
    %v389 = vsub.s32 %v386, %v388
    %v390 = vrot.slane %v376, %v389
    %v391 = vcombine.low %v383, %v390
    %v392 = vcombine.low %v250, %v251
    %v393 = vcombine.low %v252, %v253
    %v395 = vunpack.c.l.s4 1983009808
    %v396 = vunpack.c.0.s8 %v395
    %v397 = vlaneseq
    %v398 = vshrl.u32 %v397, 7
    %v399 = vsub.s32 %v396, %v398
    %v400 = vrot.slane %v392, %v399
    %v402 = vunpack.c.l.s4 1983009808
    %v403 = vunpack.c.0.s8 %v402
    %v404 = vlaneseq
    %v405 = vshrl.u32 %v404, 7
    %v406 = vsub.s32 %v403, %v405
    %v407 = vrot.slane %v393, %v406
    %v408 = vcombine.low %v400, %v407
    %v409 = vcombine.low %v254, %v255
    %v410 = vcombine.low %v256, %v257
    %v412 = vunpack.c.l.s4 1983009808
    %v413 = vunpack.c.0.s8 %v412
    %v414 = vlaneseq
    %v415 = vshrl.u32 %v414, 7
    %v416 = vsub.s32 %v413, %v415
    %v417 = vrot.slane %v409, %v416
    %v419 = vunpack.c.l.s4 1983009808
    %v420 = vunpack.c.0.s8 %v419
    %v421 = vlaneseq
    %v422 = vshrl.u32 %v421, 7
    %v423 = vsub.s32 %v420, %v422
    %v424 = vrot.slane %v410, %v423
    %v425 = vcombine.low %v417, %v424
    %434 = vst [vmem:[#allocation5] sm:$0xff] %v306
    %435 = vst [vmem:[#allocation5 + $0x8] sm:$0xff] %v323
    %436 = vst [vmem:[#allocation5 + $0x10] sm:$0xff] %v340
    %437 = vst [vmem:[#allocation5 + $0x18] sm:$0xff] %v357
    %438 = vst [vmem:[#allocation5 + $0x20] sm:$0xff] %v374
    %439 = vst [vmem:[#allocation5 + $0x28] sm:$0xff] %v391
    %440 = vst [vmem:[#allocation5 + $0x30] sm:$0xff] %v408
    %441 = vst [vmem:[#allocation5 + $0x38] sm:$0xff] %v425
    %v442 = vld [vmem:[#allocation2] sm:$0x3]
    %v443 = vld [vmem:[#allocation3] sm:$0x3]
    %v444 = vld [vmem:[#allocation5] sm:$0xff]
    %445 = vmatprep.subr.mxu0 %v99
    %446 = vmatpush1.msra.mxu0 %v98
    %447 = vmatprep.subr.mxu0 %v95
    %448 = vmatpush1.msra.mxu0 %v94
    %449 = vmatprep.subr.mxu0 %v91
    %450 = vmatpush1.msra.mxu0 %v90
    %451 = vmatprep.subr.mxu0 %v87
    %452 = vmatpush1.msra.mxu0 %v86
    %453 = vmatprep.subr.mxu0 %v83
    %454 = vmatpush1.msra.mxu0 %v82
    %455 = vmatprep.subr.mxu0 %v79
    %456 = vmatpush1.msra.mxu0 %v78
    %457 = vmatprep.subr.mxu0 %v75
    %458 = vmatpush1.msra.mxu0 %v74
    %459 = vmatprep.subr.mxu0 %v71
    %460 = vmatpush1.msra.mxu0 %v70
    %461 = vmatprep.subr.mxu0 %v67
    %462 = vmatpush1.msra.mxu0 %v66
    %463 = vmatprep.subr.mxu0 %v63
    %464 = vmatpush1.msra.mxu0 %v62
    %465 = vmatprep.subr.mxu0 %v59
    %466 = vmatpush1.msra.mxu0 %v58
    %467 = vmatprep.subr.mxu0 %v55
    %468 = vmatpush1.msra.mxu0 %v54
    %469 = vmatprep.subr.mxu0 %v51
    %470 = vmatpush1.msra.mxu0 %v50
    %471 = vmatprep.subr.mxu0 %v47
    %472 = vmatpush1.msra.mxu0 %v46
    %473 = vmatprep.subr.mxu0 %v43
    %474 = vmatpush1.msra.mxu0 %v42
    %475 = vmatprep.subr.mxu0 %v39
    %476 = vmatpush1.msra.mxu0 %v38
    %477 = vmatprep.subr.mxu0 0.0
    %478 = vmatpush2.msra.mxu0 0.0
    %479 = vmatprep.subr.mxu0 0.0
    %480 = vmatpush2.msra.mxu0 0.0
    %481 = vmatprep.subr.mxu0 0.0
    %482 = vmatpush2.msra.mxu0 0.0
    %483 = vmatprep.subr.mxu0 0.0
    %484 = vmatpush2.msra.mxu0 0.0
    %485 = vmatprep.subr.mxu0 0.0
    %486 = vmatpush2.msra.mxu0 0.0
    %487 = vmatprep.subr.mxu0 0.0
    %488 = vmatpush2.msra.mxu0 0.0
    %489 = vmatprep.subr.mxu0 0.0
    %490 = vmatpush2.msra.mxu0 0.0
    %491 = vmatprep.subr.mxu0 0.0
    %492 = vmatpush2.msra.mxu0 0.0
    %493 = vmatprep.subr.mxu0 0.0
    %494 = vmatpush2.msra.mxu0 0.0
    %495 = vmatprep.subr.mxu0 0.0
    %496 = vmatpush2.msra.mxu0 0.0
    %497 = vmatprep.subr.mxu0 0.0
    %498 = vmatpush2.msra.mxu0 0.0
    %499 = vmatprep.subr.mxu0 0.0
    %500 = vmatpush2.msra.mxu0 0.0
    %501 = vmatprep.subr.mxu0 0.0
    %502 = vmatpush2.msra.mxu0 0.0
    %503 = vmatprep.subr.mxu0 0.0
    %504 = vmatpush2.msra.mxu0 0.0
    %505 = vmatprep.subr.mxu0 0.0
    %506 = vmatpush2.msra.mxu0 0.0
    %507 = vmatprep.subr.mxu0 0.0
    %508 = vmatpush2.msra.mxu0 0.0
    %509 = vmatprep.mubr.f32.mxu0 0.0
    %510 = vmatmul.mubr.f32.gmra.mxu0 %v442
    %v511 = vpop.f32.mrf.mxu0
    %v512 = vadd.f32 0.0, %v511
    %v513 = vpop.f32.mrf.mxu0
    %v514 = vadd.f32 0.0, %v513
    %515 = vdwg.mxu0
    %516 = vmatprep.subr.mxu0 %v101
    %517 = vmatpush1.msra.mxu0 %v100
    %518 = vmatprep.subr.mxu0 %v97
    %519 = vmatpush1.msra.mxu0 %v96
    %520 = vmatprep.subr.mxu0 %v93
    %521 = vmatpush1.msra.mxu0 %v92
    %522 = vmatprep.subr.mxu0 %v89
    %523 = vmatpush1.msra.mxu0 %v88
    %524 = vmatprep.subr.mxu0 %v85
    %525 = vmatpush1.msra.mxu0 %v84
    %526 = vmatprep.subr.mxu0 %v81
    %527 = vmatpush1.msra.mxu0 %v80
    %528 = vmatprep.subr.mxu0 %v77
    %529 = vmatpush1.msra.mxu0 %v76
    %530 = vmatprep.subr.mxu0 %v73
    %531 = vmatpush1.msra.mxu0 %v72
    %532 = vmatprep.subr.mxu0 %v69
    %533 = vmatpush1.msra.mxu0 %v68
    %534 = vmatprep.subr.mxu0 %v65
    %535 = vmatpush1.msra.mxu0 %v64
    %536 = vmatprep.subr.mxu0 %v61
    %537 = vmatpush1.msra.mxu0 %v60
    %538 = vmatprep.subr.mxu0 %v57
    %539 = vmatpush1.msra.mxu0 %v56
    %540 = vmatprep.subr.mxu0 %v53
    %541 = vmatpush1.msra.mxu0 %v52
    %542 = vmatprep.subr.mxu0 %v49
    %543 = vmatpush1.msra.mxu0 %v48
    %544 = vmatprep.subr.mxu0 %v45
    %545 = vmatpush1.msra.mxu0 %v44
    %546 = vmatprep.subr.mxu0 %v41
    %547 = vmatpush1.msra.mxu0 %v40
    %548 = vmatprep.subr.mxu0 0.0
    %549 = vmatpush2.msra.mxu0 0.0
    %550 = vmatprep.subr.mxu0 0.0
    %551 = vmatpush2.msra.mxu0 0.0
    %552 = vmatprep.subr.mxu0 0.0
    %553 = vmatpush2.msra.mxu0 0.0
    %554 = vmatprep.subr.mxu0 0.0
    %555 = vmatpush2.msra.mxu0 0.0
    %556 = vmatprep.subr.mxu0 0.0
    %557 = vmatpush2.msra.mxu0 0.0
    %558 = vmatprep.subr.mxu0 0.0
    %559 = vmatpush2.msra.mxu0 0.0
    %560 = vmatprep.subr.mxu0 0.0
    %561 = vmatpush2.msra.mxu0 0.0
    %562 = vmatprep.subr.mxu0 0.0
    %563 = vmatpush2.msra.mxu0 0.0
    %564 = vmatprep.subr.mxu0 0.0
    %565 = vmatpush2.msra.mxu0 0.0
    %566 = vmatprep.subr.mxu0 0.0
    %567 = vmatpush2.msra.mxu0 0.0
    %568 = vmatprep.subr.mxu0 0.0
    %569 = vmatpush2.msra.mxu0 0.0
    %570 = vmatprep.subr.mxu0 0.0
    %571 = vmatpush2.msra.mxu0 0.0
    %572 = vmatprep.subr.mxu0 0.0
    %573 = vmatpush2.msra.mxu0 0.0
    %574 = vmatprep.subr.mxu0 0.0
    %575 = vmatpush2.msra.mxu0 0.0
    %576 = vmatprep.subr.mxu0 0.0
    %577 = vmatpush2.msra.mxu0 0.0
    %578 = vmatprep.subr.mxu0 0.0
    %579 = vmatpush2.msra.mxu0 0.0
    %580 = vmatprep.mubr.f32.mxu0 0.0
    %581 = vmatmul.mubr.f32.gmra.mxu0 %v442
    %v582 = vpop.f32.mrf.mxu0
    %v583 = vadd.f32 0.0, %v582
    %v584 = vpop.f32.mrf.mxu0
    %v585 = vadd.f32 0.0, %v584
    %586 = vdwg.mxu0
    %v591 = vcombine.low %v512, %v514
    %v592 = vcombine.low %v583, %v585
    %v594 = vunpack.c.l.s4 1983009808
    %v595 = vunpack.c.0.s8 %v594
    %v596 = vlaneseq
    %v597 = vshrl.u32 %v596, 7
    %v598 = vsub.s32 %v595, %v597
    %v599 = vrot.slane %v591, %v598
    %v601 = vunpack.c.l.s4 1983009808
    %v602 = vunpack.c.0.s8 %v601
    %v603 = vlaneseq
    %v604 = vshrl.u32 %v603, 7
    %v605 = vsub.s32 %v602, %v604
    %v606 = vrot.slane %v592, %v605
    %v607 = vcombine.low %v599, %v606
    %v609 = vadd.f32 %v444, %v607
    %v610 = vxor.u32 %v609, 2147483648
    %v611 = vmul.f32 %v610, 1.442695
    %v612 = vpow.pop %v611
    %v613 = vadd.f32 %v612, 1.0
    %v614 = vrcp.pop %v613
    %v615 = vmul.f32 1.0, %v614
    %v617 = vrot.slane %v609, 6
    %v619 = vtanh.pop %v617
    %v621 = vrot.slane %v615, 2
    %v623 = vmul.f32 %v621, %v443
    %v624 = vmul.f32 %v615, %v619
    %v625 = vadd.f32 %v623, %v624
    %v626 = vtanh.pop %v625
    %v627 = vrot.slane %v615, 4
    %v629 = vmul.f32 %v627, %v626
    %630 = vst [vmem:[#allocation4] sm:$0x3] %v629
    %s631 = scalar_lea.vmem [#allocation5], 8
    %v632 = vld [vmem:[%s631] sm:$0xff]
    %633 = vmatprep.subr.mxu0 %v99
    %634 = vmatpush1.msra.mxu0 %v98
    %635 = vmatprep.subr.mxu0 %v95
    %636 = vmatpush1.msra.mxu0 %v94
    %637 = vmatprep.subr.mxu0 %v91
    %638 = vmatpush1.msra.mxu0 %v90
    %639 = vmatprep.subr.mxu0 %v87
    %640 = vmatpush1.msra.mxu0 %v86
    %641 = vmatprep.subr.mxu0 %v83
    %642 = vmatpush1.msra.mxu0 %v82
    %643 = vmatprep.subr.mxu0 %v79
    %644 = vmatpush1.msra.mxu0 %v78
    %645 = vmatprep.subr.mxu0 %v75
    %646 = vmatpush1.msra.mxu0 %v74
    %647 = vmatprep.subr.mxu0 %v71
    %648 = vmatpush1.msra.mxu0 %v70
    %649 = vmatprep.subr.mxu0 %v67
    %650 = vmatpush1.msra.mxu0 %v66
    %651 = vmatprep.subr.mxu0 %v63
    %652 = vmatpush1.msra.mxu0 %v62
    %653 = vmatprep.subr.mxu0 %v59
    %654 = vmatpush1.msra.mxu0 %v58
    %655 = vmatprep.subr.mxu0 %v55
    %656 = vmatpush1.msra.mxu0 %v54
    %657 = vmatprep.subr.mxu0 %v51
    %658 = vmatpush1.msra.mxu0 %v50
    %659 = vmatprep.subr.mxu0 %v47
    %660 = vmatpush1.msra.mxu0 %v46
    %661 = vmatprep.subr.mxu0 %v43
    %662 = vmatpush1.msra.mxu0 %v42
    %663 = vmatprep.subr.mxu0 %v39
    %664 = vmatpush1.msra.mxu0 %v38
    %665 = vmatprep.subr.mxu0 0.0
    %666 = vmatpush2.msra.mxu0 0.0
    %667 = vmatprep.subr.mxu0 0.0
    %668 = vmatpush2.msra.mxu0 0.0
    %669 = vmatprep.subr.mxu0 0.0
    %670 = vmatpush2.msra.mxu0 0.0
    %671 = vmatprep.subr.mxu0 0.0
    %672 = vmatpush2.msra.mxu0 0.0
    %673 = vmatprep.subr.mxu0 0.0
    %674 = vmatpush2.msra.mxu0 0.0
    %675 = vmatprep.subr.mxu0 0.0
    %676 = vmatpush2.msra.mxu0 0.0
    %677 = vmatprep.subr.mxu0 0.0
    %678 = vmatpush2.msra.mxu0 0.0
    %679 = vmatprep.subr.mxu0 0.0
    %680 = vmatpush2.msra.mxu0 0.0
    %681 = vmatprep.subr.mxu0 0.0
    %682 = vmatpush2.msra.mxu0 0.0
    %683 = vmatprep.subr.mxu0 0.0
    %684 = vmatpush2.msra.mxu0 0.0
    %685 = vmatprep.subr.mxu0 0.0
    %686 = vmatpush2.msra.mxu0 0.0
    %687 = vmatprep.subr.mxu0 0.0
    %688 = vmatpush2.msra.mxu0 0.0
    %689 = vmatprep.subr.mxu0 0.0
    %690 = vmatpush2.msra.mxu0 0.0
    %691 = vmatprep.subr.mxu0 0.0
    %692 = vmatpush2.msra.mxu0 0.0
    %693 = vmatprep.subr.mxu0 0.0
    %694 = vmatpush2.msra.mxu0 0.0
    %695 = vmatprep.subr.mxu0 0.0
    %696 = vmatpush2.msra.mxu0 0.0
    %697 = vmatprep.mubr.f32.mxu0 0.0
    %698 = vmatmul.mubr.f32.gmra.mxu0 %v629
    %v699 = vpop.f32.mrf.mxu0
    %v700 = vadd.f32 0.0, %v699
    %v701 = vpop.f32.mrf.mxu0
    %v702 = vadd.f32 0.0, %v701
    %703 = vdwg.mxu0
    %704 = vmatprep.subr.mxu0 %v101
    %705 = vmatpush1.msra.mxu0 %v100
    %706 = vmatprep.subr.mxu0 %v97
    %707 = vmatpush1.msra.mxu0 %v96
    %708 = vmatprep.subr.mxu0 %v93
    %709 = vmatpush1.msra.mxu0 %v92
    %710 = vmatprep.subr.mxu0 %v89
    %711 = vmatpush1.msra.mxu0 %v88
    %712 = vmatprep.subr.mxu0 %v85
    %713 = vmatpush1.msra.mxu0 %v84
    %714 = vmatprep.subr.mxu0 %v81
    %715 = vmatpush1.msra.mxu0 %v80
    %716 = vmatprep.subr.mxu0 %v77
    %717 = vmatpush1.msra.mxu0 %v76
    %718 = vmatprep.subr.mxu0 %v73
    %719 = vmatpush1.msra.mxu0 %v72
    %720 = vmatprep.subr.mxu0 %v69
    %721 = vmatpush1.msra.mxu0 %v68
    %722 = vmatprep.subr.mxu0 %v65
    %723 = vmatpush1.msra.mxu0 %v64
    %724 = vmatprep.subr.mxu0 %v61
    %725 = vmatpush1.msra.mxu0 %v60
    %726 = vmatprep.subr.mxu0 %v57
    %727 = vmatpush1.msra.mxu0 %v56
    %728 = vmatprep.subr.mxu0 %v53
    %729 = vmatpush1.msra.mxu0 %v52
    %730 = vmatprep.subr.mxu0 %v49
    %731 = vmatpush1.msra.mxu0 %v48
    %732 = vmatprep.subr.mxu0 %v45
    %733 = vmatpush1.msra.mxu0 %v44
    %734 = vmatprep.subr.mxu0 %v41
    %735 = vmatpush1.msra.mxu0 %v40
    %736 = vmatprep.subr.mxu0 0.0
    %737 = vmatpush2.msra.mxu0 0.0
    %738 = vmatprep.subr.mxu0 0.0
    %739 = vmatpush2.msra.mxu0 0.0
    %740 = vmatprep.subr.mxu0 0.0
    %741 = vmatpush2.msra.mxu0 0.0
    %742 = vmatprep.subr.mxu0 0.0
    %743 = vmatpush2.msra.mxu0 0.0
    %744 = vmatprep.subr.mxu0 0.0
    %745 = vmatpush2.msra.mxu0 0.0
    %746 = vmatprep.subr.mxu0 0.0
    %747 = vmatpush2.msra.mxu0 0.0
    %748 = vmatprep.subr.mxu0 0.0
    %749 = vmatpush2.msra.mxu0 0.0
    %750 = vmatprep.subr.mxu0 0.0
    %751 = vmatpush2.msra.mxu0 0.0
    %752 = vmatprep.subr.mxu0 0.0
    %753 = vmatpush2.msra.mxu0 0.0
    %754 = vmatprep.subr.mxu0 0.0
    %755 = vmatpush2.msra.mxu0 0.0
    %756 = vmatprep.subr.mxu0 0.0
    %757 = vmatpush2.msra.mxu0 0.0
    %758 = vmatprep.subr.mxu0 0.0
    %759 = vmatpush2.msra.mxu0 0.0
    %760 = vmatprep.subr.mxu0 0.0
    %761 = vmatpush2.msra.mxu0 0.0
    %762 = vmatprep.subr.mxu0 0.0
    %763 = vmatpush2.msra.mxu0 0.0
    %764 = vmatprep.subr.mxu0 0.0
    %765 = vmatpush2.msra.mxu0 0.0
    %766 = vmatprep.subr.mxu0 0.0
    %767 = vmatpush2.msra.mxu0 0.0
    %768 = vmatprep.mubr.f32.mxu0 0.0
    %769 = vmatmul.mubr.f32.gmra.mxu0 %v629
    %v770 = vpop.f32.mrf.mxu0
    %v771 = vadd.f32 0.0, %v770
    %v772 = vpop.f32.mrf.mxu0
    %v773 = vadd.f32 0.0, %v772
    %774 = vdwg.mxu0
    %v779 = vcombine.low %v700, %v702
    %v780 = vcombine.low %v771, %v773
    %v782 = vunpack.c.l.s4 1983009808
    %v783 = vunpack.c.0.s8 %v782
    %v784 = vlaneseq
    %v785 = vshrl.u32 %v784, 7
    %v786 = vsub.s32 %v783, %v785
    %v787 = vrot.slane %v779, %v786
    %v789 = vunpack.c.l.s4 1983009808
    %v790 = vunpack.c.0.s8 %v789
    %v791 = vlaneseq
    %v792 = vshrl.u32 %v791, 7
    %v793 = vsub.s32 %v790, %v792
    %v794 = vrot.slane %v780, %v793
    %v795 = vcombine.low %v787, %v794
    %v797 = vadd.f32 %v632, %v795
    %v798 = vxor.u32 %v797, 2147483648
    %v799 = vmul.f32 %v798, 1.442695
    %v800 = vpow.pop %v799
    %v801 = vadd.f32 %v800, 1.0
    %v802 = vrcp.pop %v801
    %v803 = vmul.f32 1.0, %v802
    %v805 = vrot.slane %v797, 6
    %v807 = vtanh.pop %v805
    %v809 = vrot.slane %v803, 2
    %v811 = vmul.f32 %v809, %v625
    %v812 = vmul.f32 %v803, %v807
    %v813 = vadd.f32 %v811, %v812
    %v814 = vtanh.pop %v813
    %v815 = vrot.slane %v803, 4
    %v817 = vmul.f32 %v815, %v814
    %s818 = scalar_lea.vmem [#allocation4], 2
    %819 = vst [vmem:[%s818] sm:$0x3] %v817
    %s820 = scalar_lea.vmem [#allocation5], 16
    %v821 = vld [vmem:[%s820] sm:$0xff]
    %822 = vmatprep.subr.mxu0 %v99
    %823 = vmatpush1.msra.mxu0 %v98
    %824 = vmatprep.subr.mxu0 %v95
    %825 = vmatpush1.msra.mxu0 %v94
    %826 = vmatprep.subr.mxu0 %v91
    %827 = vmatpush1.msra.mxu0 %v90
    %828 = vmatprep.subr.mxu0 %v87
    %829 = vmatpush1.msra.mxu0 %v86
    %830 = vmatprep.subr.mxu0 %v83
    %831 = vmatpush1.msra.mxu0 %v82
    %832 = vmatprep.subr.mxu0 %v79
    %833 = vmatpush1.msra.mxu0 %v78
    %834 = vmatprep.subr.mxu0 %v75
    %835 = vmatpush1.msra.mxu0 %v74
    %836 = vmatprep.subr.mxu0 %v71
    %837 = vmatpush1.msra.mxu0 %v70
    %838 = vmatprep.subr.mxu0 %v67
    %839 = vmatpush1.msra.mxu0 %v66
    %840 = vmatprep.subr.mxu0 %v63
    %841 = vmatpush1.msra.mxu0 %v62
    %842 = vmatprep.subr.mxu0 %v59
    %843 = vmatpush1.msra.mxu0 %v58
    %844 = vmatprep.subr.mxu0 %v55
    %845 = vmatpush1.msra.mxu0 %v54
    %846 = vmatprep.subr.mxu0 %v51
    %847 = vmatpush1.msra.mxu0 %v50
    %848 = vmatprep.subr.mxu0 %v47
    %849 = vmatpush1.msra.mxu0 %v46
    %850 = vmatprep.subr.mxu0 %v43
    %851 = vmatpush1.msra.mxu0 %v42
    %852 = vmatprep.subr.mxu0 %v39
    %853 = vmatpush1.msra.mxu0 %v38
    %854 = vmatprep.subr.mxu0 0.0
    %855 = vmatpush2.msra.mxu0 0.0
    %856 = vmatprep.subr.mxu0 0.0
    %857 = vmatpush2.msra.mxu0 0.0
    %858 = vmatprep.subr.mxu0 0.0
    %859 = vmatpush2.msra.mxu0 0.0
    %860 = vmatprep.subr.mxu0 0.0
    %861 = vmatpush2.msra.mxu0 0.0
    %862 = vmatprep.subr.mxu0 0.0
    %863 = vmatpush2.msra.mxu0 0.0
    %864 = vmatprep.subr.mxu0 0.0
    %865 = vmatpush2.msra.mxu0 0.0
    %866 = vmatprep.subr.mxu0 0.0
    %867 = vmatpush2.msra.mxu0 0.0
    %868 = vmatprep.subr.mxu0 0.0
    %869 = vmatpush2.msra.mxu0 0.0
    %870 = vmatprep.subr.mxu0 0.0
    %871 = vmatpush2.msra.mxu0 0.0
    %872 = vmatprep.subr.mxu0 0.0
    %873 = vmatpush2.msra.mxu0 0.0
    %874 = vmatprep.subr.mxu0 0.0
    %875 = vmatpush2.msra.mxu0 0.0
    %876 = vmatprep.subr.mxu0 0.0
    %877 = vmatpush2.msra.mxu0 0.0
    %878 = vmatprep.subr.mxu0 0.0
    %879 = vmatpush2.msra.mxu0 0.0
    %880 = vmatprep.subr.mxu0 0.0
    %881 = vmatpush2.msra.mxu0 0.0
    %882 = vmatprep.subr.mxu0 0.0
    %883 = vmatpush2.msra.mxu0 0.0
    %884 = vmatprep.subr.mxu0 0.0
    %885 = vmatpush2.msra.mxu0 0.0
    %886 = vmatprep.mubr.f32.mxu0 0.0
    %887 = vmatmul.mubr.f32.gmra.mxu0 %v817
    %v888 = vpop.f32.mrf.mxu0
    %v889 = vadd.f32 0.0, %v888
    %v890 = vpop.f32.mrf.mxu0
    %v891 = vadd.f32 0.0, %v890
    %892 = vdwg.mxu0
    %893 = vmatprep.subr.mxu0 %v101
    %894 = vmatpush1.msra.mxu0 %v100
    %895 = vmatprep.subr.mxu0 %v97
    %896 = vmatpush1.msra.mxu0 %v96
    %897 = vmatprep.subr.mxu0 %v93
    %898 = vmatpush1.msra.mxu0 %v92
    %899 = vmatprep.subr.mxu0 %v89
    %900 = vmatpush1.msra.mxu0 %v88
    %901 = vmatprep.subr.mxu0 %v85
    %902 = vmatpush1.msra.mxu0 %v84
    %903 = vmatprep.subr.mxu0 %v81
    %904 = vmatpush1.msra.mxu0 %v80
    %905 = vmatprep.subr.mxu0 %v77
    %906 = vmatpush1.msra.mxu0 %v76
    %907 = vmatprep.subr.mxu0 %v73
    %908 = vmatpush1.msra.mxu0 %v72
    %909 = vmatprep.subr.mxu0 %v69
    %910 = vmatpush1.msra.mxu0 %v68
    %911 = vmatprep.subr.mxu0 %v65
    %912 = vmatpush1.msra.mxu0 %v64
    %913 = vmatprep.subr.mxu0 %v61
    %914 = vmatpush1.msra.mxu0 %v60
    %915 = vmatprep.subr.mxu0 %v57
    %916 = vmatpush1.msra.mxu0 %v56
    %917 = vmatprep.subr.mxu0 %v53
    %918 = vmatpush1.msra.mxu0 %v52
    %919 = vmatprep.subr.mxu0 %v49
    %920 = vmatpush1.msra.mxu0 %v48
    %921 = vmatprep.subr.mxu0 %v45
    %922 = vmatpush1.msra.mxu0 %v44
    %923 = vmatprep.subr.mxu0 %v41
    %924 = vmatpush1.msra.mxu0 %v40
    %925 = vmatprep.subr.mxu0 0.0
    %926 = vmatpush2.msra.mxu0 0.0
    %927 = vmatprep.subr.mxu0 0.0
    %928 = vmatpush2.msra.mxu0 0.0
    %929 = vmatprep.subr.mxu0 0.0
    %930 = vmatpush2.msra.mxu0 0.0
    %931 = vmatprep.subr.mxu0 0.0
    %932 = vmatpush2.msra.mxu0 0.0
    %933 = vmatprep.subr.mxu0 0.0
    %934 = vmatpush2.msra.mxu0 0.0
    %935 = vmatprep.subr.mxu0 0.0
    %936 = vmatpush2.msra.mxu0 0.0
    %937 = vmatprep.subr.mxu0 0.0
    %938 = vmatpush2.msra.mxu0 0.0
    %939 = vmatprep.subr.mxu0 0.0
    %940 = vmatpush2.msra.mxu0 0.0
    %941 = vmatprep.subr.mxu0 0.0
    %942 = vmatpush2.msra.mxu0 0.0
    %943 = vmatprep.subr.mxu0 0.0
    %944 = vmatpush2.msra.mxu0 0.0
    %945 = vmatprep.subr.mxu0 0.0
    %946 = vmatpush2.msra.mxu0 0.0
    %947 = vmatprep.subr.mxu0 0.0
    %948 = vmatpush2.msra.mxu0 0.0
    %949 = vmatprep.subr.mxu0 0.0
    %950 = vmatpush2.msra.mxu0 0.0
    %951 = vmatprep.subr.mxu0 0.0
    %952 = vmatpush2.msra.mxu0 0.0
    %953 = vmatprep.subr.mxu0 0.0
    %954 = vmatpush2.msra.mxu0 0.0
    %955 = vmatprep.subr.mxu0 0.0
    %956 = vmatpush2.msra.mxu0 0.0
    %957 = vmatprep.mubr.f32.mxu0 0.0
    %958 = vmatmul.mubr.f32.gmra.mxu0 %v817
    %v959 = vpop.f32.mrf.mxu0
    %v960 = vadd.f32 0.0, %v959
    %v961 = vpop.f32.mrf.mxu0
    %v962 = vadd.f32 0.0, %v961
    %963 = vdwg.mxu0
    %v968 = vcombine.low %v889, %v891
    %v969 = vcombine.low %v960, %v962
    %v971 = vunpack.c.l.s4 1983009808
    %v972 = vunpack.c.0.s8 %v971
    %v973 = vlaneseq
    %v974 = vshrl.u32 %v973, 7
    %v975 = vsub.s32 %v972, %v974
    %v976 = vrot.slane %v968, %v975
    %v978 = vunpack.c.l.s4 1983009808
    %v979 = vunpack.c.0.s8 %v978
    %v980 = vlaneseq
    %v981 = vshrl.u32 %v980, 7
    %v982 = vsub.s32 %v979, %v981
    %v983 = vrot.slane %v969, %v982
    %v984 = vcombine.low %v976, %v983
    %v986 = vadd.f32 %v821, %v984
    %v987 = vxor.u32 %v986, 2147483648
    %v988 = vmul.f32 %v987, 1.442695
    %v989 = vpow.pop %v988
    %v990 = vadd.f32 %v989, 1.0
    %v991 = vrcp.pop %v990
    %v992 = vmul.f32 1.0, %v991
    %v994 = vrot.slane %v986, 6
    %v996 = vtanh.pop %v994
    %v998 = vrot.slane %v992, 2
    %v1000 = vmul.f32 %v998, %v813
    %v1001 = vmul.f32 %v992, %v996
    %v1002 = vadd.f32 %v1000, %v1001
    %v1003 = vtanh.pop %v1002
    %v1004 = vrot.slane %v992, 4
    %v1006 = vmul.f32 %v1004, %v1003
    %s1007 = scalar_lea.vmem [#allocation4], 4
    %1008 = vst [vmem:[%s1007] sm:$0x3] %v1006
    %s1009 = scalar_lea.vmem [#allocation5], 24
    %v1010 = vld [vmem:[%s1009] sm:$0xff]
    %1011 = vmatprep.subr.mxu0 %v99
    %1012 = vmatpush1.msra.mxu0 %v98
    %1013 = vmatprep.subr.mxu0 %v95
    %1014 = vmatpush1.msra.mxu0 %v94
    %1015 = vmatprep.subr.mxu0 %v91
    %1016 = vmatpush1.msra.mxu0 %v90
    %1017 = vmatprep.subr.mxu0 %v87
    %1018 = vmatpush1.msra.mxu0 %v86
    %1019 = vmatprep.subr.mxu0 %v83
    %1020 = vmatpush1.msra.mxu0 %v82
    %1021 = vmatprep.subr.mxu0 %v79
    %1022 = vmatpush1.msra.mxu0 %v78
    %1023 = vmatprep.subr.mxu0 %v75
    %1024 = vmatpush1.msra.mxu0 %v74
    %1025 = vmatprep.subr.mxu0 %v71
    %1026 = vmatpush1.msra.mxu0 %v70
    %1027 = vmatprep.subr.mxu0 %v67
    %1028 = vmatpush1.msra.mxu0 %v66
    %1029 = vmatprep.subr.mxu0 %v63
    %1030 = vmatpush1.msra.mxu0 %v62
    %1031 = vmatprep.subr.mxu0 %v59
    %1032 = vmatpush1.msra.mxu0 %v58
    %1033 = vmatprep.subr.mxu0 %v55
    %1034 = vmatpush1.msra.mxu0 %v54
    %1035 = vmatprep.subr.mxu0 %v51
    %1036 = vmatpush1.msra.mxu0 %v50
    %1037 = vmatprep.subr.mxu0 %v47
    %1038 = vmatpush1.msra.mxu0 %v46
    %1039 = vmatprep.subr.mxu0 %v43
    %1040 = vmatpush1.msra.mxu0 %v42
    %1041 = vmatprep.subr.mxu0 %v39
    %1042 = vmatpush1.msra.mxu0 %v38
    %1043 = vmatprep.subr.mxu0 0.0
    %1044 = vmatpush2.msra.mxu0 0.0
    %1045 = vmatprep.subr.mxu0 0.0
    %1046 = vmatpush2.msra.mxu0 0.0
    %1047 = vmatprep.subr.mxu0 0.0
    %1048 = vmatpush2.msra.mxu0 0.0
    %1049 = vmatprep.subr.mxu0 0.0
    %1050 = vmatpush2.msra.mxu0 0.0
    %1051 = vmatprep.subr.mxu0 0.0
    %1052 = vmatpush2.msra.mxu0 0.0
    %1053 = vmatprep.subr.mxu0 0.0
    %1054 = vmatpush2.msra.mxu0 0.0
    %1055 = vmatprep.subr.mxu0 0.0
    %1056 = vmatpush2.msra.mxu0 0.0
    %1057 = vmatprep.subr.mxu0 0.0
    %1058 = vmatpush2.msra.mxu0 0.0
    %1059 = vmatprep.subr.mxu0 0.0
    %1060 = vmatpush2.msra.mxu0 0.0
    %1061 = vmatprep.subr.mxu0 0.0
    %1062 = vmatpush2.msra.mxu0 0.0
    %1063 = vmatprep.subr.mxu0 0.0
    %1064 = vmatpush2.msra.mxu0 0.0
    %1065 = vmatprep.subr.mxu0 0.0
    %1066 = vmatpush2.msra.mxu0 0.0
    %1067 = vmatprep.subr.mxu0 0.0
    %1068 = vmatpush2.msra.mxu0 0.0
    %1069 = vmatprep.subr.mxu0 0.0
    %1070 = vmatpush2.msra.mxu0 0.0
    %1071 = vmatprep.subr.mxu0 0.0
    %1072 = vmatpush2.msra.mxu0 0.0
    %1073 = vmatprep.subr.mxu0 0.0
    %1074 = vmatpush2.msra.mxu0 0.0
    %1075 = vmatprep.mubr.f32.mxu0 0.0
    %1076 = vmatmul.mubr.f32.gmra.mxu0 %v1006
    %v1077 = vpop.f32.mrf.mxu0
    %v1078 = vadd.f32 0.0, %v1077
    %v1079 = vpop.f32.mrf.mxu0
    %v1080 = vadd.f32 0.0, %v1079
    %1081 = vdwg.mxu0
    %1082 = vmatprep.subr.mxu0 %v101
    %1083 = vmatpush1.msra.mxu0 %v100
    %1084 = vmatprep.subr.mxu0 %v97
    %1085 = vmatpush1.msra.mxu0 %v96
    %1086 = vmatprep.subr.mxu0 %v93
    %1087 = vmatpush1.msra.mxu0 %v92
    %1088 = vmatprep.subr.mxu0 %v89
    %1089 = vmatpush1.msra.mxu0 %v88
    %1090 = vmatprep.subr.mxu0 %v85
    %1091 = vmatpush1.msra.mxu0 %v84
    %1092 = vmatprep.subr.mxu0 %v81
    %1093 = vmatpush1.msra.mxu0 %v80
    %1094 = vmatprep.subr.mxu0 %v77
    %1095 = vmatpush1.msra.mxu0 %v76
    %1096 = vmatprep.subr.mxu0 %v73
    %1097 = vmatpush1.msra.mxu0 %v72
    %1098 = vmatprep.subr.mxu0 %v69
    %1099 = vmatpush1.msra.mxu0 %v68
    %1100 = vmatprep.subr.mxu0 %v65
    %1101 = vmatpush1.msra.mxu0 %v64
    %1102 = vmatprep.subr.mxu0 %v61
    %1103 = vmatpush1.msra.mxu0 %v60
    %1104 = vmatprep.subr.mxu0 %v57
    %1105 = vmatpush1.msra.mxu0 %v56
    %1106 = vmatprep.subr.mxu0 %v53
    %1107 = vmatpush1.msra.mxu0 %v52
    %1108 = vmatprep.subr.mxu0 %v49
    %1109 = vmatpush1.msra.mxu0 %v48
    %1110 = vmatprep.subr.mxu0 %v45
    %1111 = vmatpush1.msra.mxu0 %v44
    %1112 = vmatprep.subr.mxu0 %v41
    %1113 = vmatpush1.msra.mxu0 %v40
    %1114 = vmatprep.subr.mxu0 0.0
    %1115 = vmatpush2.msra.mxu0 0.0
    %1116 = vmatprep.subr.mxu0 0.0
    %1117 = vmatpush2.msra.mxu0 0.0
    %1118 = vmatprep.subr.mxu0 0.0
    %1119 = vmatpush2.msra.mxu0 0.0
    %1120 = vmatprep.subr.mxu0 0.0
    %1121 = vmatpush2.msra.mxu0 0.0
    %1122 = vmatprep.subr.mxu0 0.0
    %1123 = vmatpush2.msra.mxu0 0.0
    %1124 = vmatprep.subr.mxu0 0.0
    %1125 = vmatpush2.msra.mxu0 0.0
    %1126 = vmatprep.subr.mxu0 0.0
    %1127 = vmatpush2.msra.mxu0 0.0
    %1128 = vmatprep.subr.mxu0 0.0
    %1129 = vmatpush2.msra.mxu0 0.0
    %1130 = vmatprep.subr.mxu0 0.0
    %1131 = vmatpush2.msra.mxu0 0.0
    %1132 = vmatprep.subr.mxu0 0.0
    %1133 = vmatpush2.msra.mxu0 0.0
    %1134 = vmatprep.subr.mxu0 0.0
    %1135 = vmatpush2.msra.mxu0 0.0
    %1136 = vmatprep.subr.mxu0 0.0
    %1137 = vmatpush2.msra.mxu0 0.0
    %1138 = vmatprep.subr.mxu0 0.0
    %1139 = vmatpush2.msra.mxu0 0.0
    %1140 = vmatprep.subr.mxu0 0.0
    %1141 = vmatpush2.msra.mxu0 0.0
    %1142 = vmatprep.subr.mxu0 0.0
    %1143 = vmatpush2.msra.mxu0 0.0
    %1144 = vmatprep.subr.mxu0 0.0
    %1145 = vmatpush2.msra.mxu0 0.0
    %1146 = vmatprep.mubr.f32.mxu0 0.0
    %1147 = vmatmul.mubr.f32.gmra.mxu0 %v1006
    %v1148 = vpop.f32.mrf.mxu0
    %v1149 = vadd.f32 0.0, %v1148
    %v1150 = vpop.f32.mrf.mxu0
    %v1151 = vadd.f32 0.0, %v1150
    %1152 = vdwg.mxu0
    %v1157 = vcombine.low %v1078, %v1080
    %v1158 = vcombine.low %v1149, %v1151
    %v1160 = vunpack.c.l.s4 1983009808
    %v1161 = vunpack.c.0.s8 %v1160
    %v1162 = vlaneseq
    %v1163 = vshrl.u32 %v1162, 7
    %v1164 = vsub.s32 %v1161, %v1163
    %v1165 = vrot.slane %v1157, %v1164
    %v1167 = vunpack.c.l.s4 1983009808
    %v1168 = vunpack.c.0.s8 %v1167
    %v1169 = vlaneseq
    %v1170 = vshrl.u32 %v1169, 7
    %v1171 = vsub.s32 %v1168, %v1170
    %v1172 = vrot.slane %v1158, %v1171
    %v1173 = vcombine.low %v1165, %v1172
    %v1175 = vadd.f32 %v1010, %v1173
    %v1176 = vxor.u32 %v1175, 2147483648
    %v1177 = vmul.f32 %v1176, 1.442695
    %v1178 = vpow.pop %v1177
    %v1179 = vadd.f32 %v1178, 1.0
    %v1180 = vrcp.pop %v1179
    %v1181 = vmul.f32 1.0, %v1180
    %v1183 = vrot.slane %v1175, 6
    %v1185 = vtanh.pop %v1183
    %v1187 = vrot.slane %v1181, 2
    %v1189 = vmul.f32 %v1187, %v1002
    %v1190 = vmul.f32 %v1181, %v1185
    %v1191 = vadd.f32 %v1189, %v1190
    %v1192 = vtanh.pop %v1191
    %v1193 = vrot.slane %v1181, 4
    %v1195 = vmul.f32 %v1193, %v1192
    %s1196 = scalar_lea.vmem [#allocation4], 6
    %1197 = vst [vmem:[%s1196] sm:$0x3] %v1195
    %s1198 = scalar_lea.vmem [#allocation5], 32
    %v1199 = vld [vmem:[%s1198] sm:$0xff]
    %1200 = vmatprep.subr.mxu0 %v99
    %1201 = vmatpush1.msra.mxu0 %v98
    %1202 = vmatprep.subr.mxu0 %v95
    %1203 = vmatpush1.msra.mxu0 %v94
    %1204 = vmatprep.subr.mxu0 %v91
    %1205 = vmatpush1.msra.mxu0 %v90
    %1206 = vmatprep.subr.mxu0 %v87
    %1207 = vmatpush1.msra.mxu0 %v86
    %1208 = vmatprep.subr.mxu0 %v83
    %1209 = vmatpush1.msra.mxu0 %v82
    %1210 = vmatprep.subr.mxu0 %v79
    %1211 = vmatpush1.msra.mxu0 %v78
    %1212 = vmatprep.subr.mxu0 %v75
    %1213 = vmatpush1.msra.mxu0 %v74
    %1214 = vmatprep.subr.mxu0 %v71
    %1215 = vmatpush1.msra.mxu0 %v70
    %1216 = vmatprep.subr.mxu0 %v67
    %1217 = vmatpush1.msra.mxu0 %v66
    %1218 = vmatprep.subr.mxu0 %v63
    %1219 = vmatpush1.msra.mxu0 %v62
    %1220 = vmatprep.subr.mxu0 %v59
    %1221 = vmatpush1.msra.mxu0 %v58
    %1222 = vmatprep.subr.mxu0 %v55
    %1223 = vmatpush1.msra.mxu0 %v54
    %1224 = vmatprep.subr.mxu0 %v51
    %1225 = vmatpush1.msra.mxu0 %v50
    %1226 = vmatprep.subr.mxu0 %v47
    %1227 = vmatpush1.msra.mxu0 %v46
    %1228 = vmatprep.subr.mxu0 %v43
    %1229 = vmatpush1.msra.mxu0 %v42
    %1230 = vmatprep.subr.mxu0 %v39
    %1231 = vmatpush1.msra.mxu0 %v38
    %1232 = vmatprep.subr.mxu0 0.0
    %1233 = vmatpush2.msra.mxu0 0.0
    %1234 = vmatprep.subr.mxu0 0.0
    %1235 = vmatpush2.msra.mxu0 0.0
    %1236 = vmatprep.subr.mxu0 0.0
    %1237 = vmatpush2.msra.mxu0 0.0
    %1238 = vmatprep.subr.mxu0 0.0
    %1239 = vmatpush2.msra.mxu0 0.0
    %1240 = vmatprep.subr.mxu0 0.0
    %1241 = vmatpush2.msra.mxu0 0.0
    %1242 = vmatprep.subr.mxu0 0.0
    %1243 = vmatpush2.msra.mxu0 0.0
    %1244 = vmatprep.subr.mxu0 0.0
    %1245 = vmatpush2.msra.mxu0 0.0
    %1246 = vmatprep.subr.mxu0 0.0
    %1247 = vmatpush2.msra.mxu0 0.0
    %1248 = vmatprep.subr.mxu0 0.0
    %1249 = vmatpush2.msra.mxu0 0.0
    %1250 = vmatprep.subr.mxu0 0.0
    %1251 = vmatpush2.msra.mxu0 0.0
    %1252 = vmatprep.subr.mxu0 0.0
    %1253 = vmatpush2.msra.mxu0 0.0
    %1254 = vmatprep.subr.mxu0 0.0
    %1255 = vmatpush2.msra.mxu0 0.0
    %1256 = vmatprep.subr.mxu0 0.0
    %1257 = vmatpush2.msra.mxu0 0.0
    %1258 = vmatprep.subr.mxu0 0.0
    %1259 = vmatpush2.msra.mxu0 0.0
    %1260 = vmatprep.subr.mxu0 0.0
    %1261 = vmatpush2.msra.mxu0 0.0
    %1262 = vmatprep.subr.mxu0 0.0
    %1263 = vmatpush2.msra.mxu0 0.0
    %1264 = vmatprep.mubr.f32.mxu0 0.0
    %1265 = vmatmul.mubr.f32.gmra.mxu0 %v1195
    %v1266 = vpop.f32.mrf.mxu0
    %v1267 = vadd.f32 0.0, %v1266
    %v1268 = vpop.f32.mrf.mxu0
    %v1269 = vadd.f32 0.0, %v1268
    %1270 = vdwg.mxu0
    %1271 = vmatprep.subr.mxu0 %v101
    %1272 = vmatpush1.msra.mxu0 %v100
    %1273 = vmatprep.subr.mxu0 %v97
    %1274 = vmatpush1.msra.mxu0 %v96
    %1275 = vmatprep.subr.mxu0 %v93
    %1276 = vmatpush1.msra.mxu0 %v92
    %1277 = vmatprep.subr.mxu0 %v89
    %1278 = vmatpush1.msra.mxu0 %v88
    %1279 = vmatprep.subr.mxu0 %v85
    %1280 = vmatpush1.msra.mxu0 %v84
    %1281 = vmatprep.subr.mxu0 %v81
    %1282 = vmatpush1.msra.mxu0 %v80
    %1283 = vmatprep.subr.mxu0 %v77
    %1284 = vmatpush1.msra.mxu0 %v76
    %1285 = vmatprep.subr.mxu0 %v73
    %1286 = vmatpush1.msra.mxu0 %v72
    %1287 = vmatprep.subr.mxu0 %v69
    %1288 = vmatpush1.msra.mxu0 %v68
    %1289 = vmatprep.subr.mxu0 %v65
    %1290 = vmatpush1.msra.mxu0 %v64
    %1291 = vmatprep.subr.mxu0 %v61
    %1292 = vmatpush1.msra.mxu0 %v60
    %1293 = vmatprep.subr.mxu0 %v57
    %1294 = vmatpush1.msra.mxu0 %v56
    %1295 = vmatprep.subr.mxu0 %v53
    %1296 = vmatpush1.msra.mxu0 %v52
    %1297 = vmatprep.subr.mxu0 %v49
    %1298 = vmatpush1.msra.mxu0 %v48
    %1299 = vmatprep.subr.mxu0 %v45
    %1300 = vmatpush1.msra.mxu0 %v44
    %1301 = vmatprep.subr.mxu0 %v41
    %1302 = vmatpush1.msra.mxu0 %v40
    %1303 = vmatprep.subr.mxu0 0.0
    %1304 = vmatpush2.msra.mxu0 0.0
    %1305 = vmatprep.subr.mxu0 0.0
    %1306 = vmatpush2.msra.mxu0 0.0
    %1307 = vmatprep.subr.mxu0 0.0
    %1308 = vmatpush2.msra.mxu0 0.0
    %1309 = vmatprep.subr.mxu0 0.0
    %1310 = vmatpush2.msra.mxu0 0.0
    %1311 = vmatprep.subr.mxu0 0.0
    %1312 = vmatpush2.msra.mxu0 0.0
    %1313 = vmatprep.subr.mxu0 0.0
    %1314 = vmatpush2.msra.mxu0 0.0
    %1315 = vmatprep.subr.mxu0 0.0
    %1316 = vmatpush2.msra.mxu0 0.0
    %1317 = vmatprep.subr.mxu0 0.0
    %1318 = vmatpush2.msra.mxu0 0.0
    %1319 = vmatprep.subr.mxu0 0.0
    %1320 = vmatpush2.msra.mxu0 0.0
    %1321 = vmatprep.subr.mxu0 0.0
    %1322 = vmatpush2.msra.mxu0 0.0
    %1323 = vmatprep.subr.mxu0 0.0
    %1324 = vmatpush2.msra.mxu0 0.0
    %1325 = vmatprep.subr.mxu0 0.0
    %1326 = vmatpush2.msra.mxu0 0.0
    %1327 = vmatprep.subr.mxu0 0.0
    %1328 = vmatpush2.msra.mxu0 0.0
    %1329 = vmatprep.subr.mxu0 0.0
    %1330 = vmatpush2.msra.mxu0 0.0
    %1331 = vmatprep.subr.mxu0 0.0
    %1332 = vmatpush2.msra.mxu0 0.0
    %1333 = vmatprep.subr.mxu0 0.0
    %1334 = vmatpush2.msra.mxu0 0.0
    %1335 = vmatprep.mubr.f32.mxu0 0.0
    %1336 = vmatmul.mubr.f32.gmra.mxu0 %v1195
    %v1337 = vpop.f32.mrf.mxu0
    %v1338 = vadd.f32 0.0, %v1337
    %v1339 = vpop.f32.mrf.mxu0
    %v1340 = vadd.f32 0.0, %v1339
    %1341 = vdwg.mxu0
    %v1346 = vcombine.low %v1267, %v1269
    %v1347 = vcombine.low %v1338, %v1340
    %v1349 = vunpack.c.l.s4 1983009808
    %v1350 = vunpack.c.0.s8 %v1349
    %v1351 = vlaneseq
    %v1352 = vshrl.u32 %v1351, 7
    %v1353 = vsub.s32 %v1350, %v1352
    %v1354 = vrot.slane %v1346, %v1353
    %v1356 = vunpack.c.l.s4 1983009808
    %v1357 = vunpack.c.0.s8 %v1356
    %v1358 = vlaneseq
    %v1359 = vshrl.u32 %v1358, 7
    %v1360 = vsub.s32 %v1357, %v1359
    %v1361 = vrot.slane %v1347, %v1360
    %v1362 = vcombine.low %v1354, %v1361
    %v1364 = vadd.f32 %v1199, %v1362
    %v1365 = vxor.u32 %v1364, 2147483648
    %v1366 = vmul.f32 %v1365, 1.442695
    %v1367 = vpow.pop %v1366
    %v1368 = vadd.f32 %v1367, 1.0
    %v1369 = vrcp.pop %v1368
    %v1370 = vmul.f32 1.0, %v1369
    %v1372 = vrot.slane %v1364, 6
    %v1374 = vtanh.pop %v1372
    %v1376 = vrot.slane %v1370, 2
    %v1378 = vmul.f32 %v1376, %v1191
    %v1379 = vmul.f32 %v1370, %v1374
    %v1380 = vadd.f32 %v1378, %v1379
    %v1381 = vtanh.pop %v1380
    %v1382 = vrot.slane %v1370, 4
    %v1384 = vmul.f32 %v1382, %v1381
    %s1385 = scalar_lea.vmem [#allocation4], 8
    %1386 = vst [vmem:[%s1385] sm:$0x3] %v1384
    %s1387 = scalar_lea.vmem [#allocation5], 40
    %v1388 = vld [vmem:[%s1387] sm:$0xff]
    %1389 = vmatprep.subr.mxu0 %v99
    %1390 = vmatpush1.msra.mxu0 %v98
    %1391 = vmatprep.subr.mxu0 %v95
    %1392 = vmatpush1.msra.mxu0 %v94
    %1393 = vmatprep.subr.mxu0 %v91
    %1394 = vmatpush1.msra.mxu0 %v90
    %1395 = vmatprep.subr.mxu0 %v87
    %1396 = vmatpush1.msra.mxu0 %v86
    %1397 = vmatprep.subr.mxu0 %v83
    %1398 = vmatpush1.msra.mxu0 %v82
    %1399 = vmatprep.subr.mxu0 %v79
    %1400 = vmatpush1.msra.mxu0 %v78
    %1401 = vmatprep.subr.mxu0 %v75
    %1402 = vmatpush1.msra.mxu0 %v74
    %1403 = vmatprep.subr.mxu0 %v71
    %1404 = vmatpush1.msra.mxu0 %v70
    %1405 = vmatprep.subr.mxu0 %v67
    %1406 = vmatpush1.msra.mxu0 %v66
    %1407 = vmatprep.subr.mxu0 %v63
    %1408 = vmatpush1.msra.mxu0 %v62
    %1409 = vmatprep.subr.mxu0 %v59
    %1410 = vmatpush1.msra.mxu0 %v58
    %1411 = vmatprep.subr.mxu0 %v55
    %1412 = vmatpush1.msra.mxu0 %v54
    %1413 = vmatprep.subr.mxu0 %v51
    %1414 = vmatpush1.msra.mxu0 %v50
    %1415 = vmatprep.subr.mxu0 %v47
    %1416 = vmatpush1.msra.mxu0 %v46
    %1417 = vmatprep.subr.mxu0 %v43
    %1418 = vmatpush1.msra.mxu0 %v42
    %1419 = vmatprep.subr.mxu0 %v39
    %1420 = vmatpush1.msra.mxu0 %v38
    %1421 = vmatprep.subr.mxu0 0.0
    %1422 = vmatpush2.msra.mxu0 0.0
    %1423 = vmatprep.subr.mxu0 0.0
    %1424 = vmatpush2.msra.mxu0 0.0
    %1425 = vmatprep.subr.mxu0 0.0
    %1426 = vmatpush2.msra.mxu0 0.0
    %1427 = vmatprep.subr.mxu0 0.0
    %1428 = vmatpush2.msra.mxu0 0.0
    %1429 = vmatprep.subr.mxu0 0.0
    %1430 = vmatpush2.msra.mxu0 0.0
    %1431 = vmatprep.subr.mxu0 0.0
    %1432 = vmatpush2.msra.mxu0 0.0
    %1433 = vmatprep.subr.mxu0 0.0
    %1434 = vmatpush2.msra.mxu0 0.0
    %1435 = vmatprep.subr.mxu0 0.0
    %1436 = vmatpush2.msra.mxu0 0.0
    %1437 = vmatprep.subr.mxu0 0.0
    %1438 = vmatpush2.msra.mxu0 0.0
    %1439 = vmatprep.subr.mxu0 0.0
    %1440 = vmatpush2.msra.mxu0 0.0
    %1441 = vmatprep.subr.mxu0 0.0
    %1442 = vmatpush2.msra.mxu0 0.0
    %1443 = vmatprep.subr.mxu0 0.0
    %1444 = vmatpush2.msra.mxu0 0.0
    %1445 = vmatprep.subr.mxu0 0.0
    %1446 = vmatpush2.msra.mxu0 0.0
    %1447 = vmatprep.subr.mxu0 0.0
    %1448 = vmatpush2.msra.mxu0 0.0
    %1449 = vmatprep.subr.mxu0 0.0
    %1450 = vmatpush2.msra.mxu0 0.0
    %1451 = vmatprep.subr.mxu0 0.0
    %1452 = vmatpush2.msra.mxu0 0.0
    %1453 = vmatprep.mubr.f32.mxu0 0.0
    %1454 = vmatmul.mubr.f32.gmra.mxu0 %v1384
    %v1455 = vpop.f32.mrf.mxu0
    %v1456 = vadd.f32 0.0, %v1455
    %v1457 = vpop.f32.mrf.mxu0
    %v1458 = vadd.f32 0.0, %v1457
    %1459 = vdwg.mxu0
    %1460 = vmatprep.subr.mxu0 %v101
    %1461 = vmatpush1.msra.mxu0 %v100
    %1462 = vmatprep.subr.mxu0 %v97
    %1463 = vmatpush1.msra.mxu0 %v96
    %1464 = vmatprep.subr.mxu0 %v93
    %1465 = vmatpush1.msra.mxu0 %v92
    %1466 = vmatprep.subr.mxu0 %v89
    %1467 = vmatpush1.msra.mxu0 %v88
    %1468 = vmatprep.subr.mxu0 %v85
    %1469 = vmatpush1.msra.mxu0 %v84
    %1470 = vmatprep.subr.mxu0 %v81
    %1471 = vmatpush1.msra.mxu0 %v80
    %1472 = vmatprep.subr.mxu0 %v77
    %1473 = vmatpush1.msra.mxu0 %v76
    %1474 = vmatprep.subr.mxu0 %v73
    %1475 = vmatpush1.msra.mxu0 %v72
    %1476 = vmatprep.subr.mxu0 %v69
    %1477 = vmatpush1.msra.mxu0 %v68
    %1478 = vmatprep.subr.mxu0 %v65
    %1479 = vmatpush1.msra.mxu0 %v64
    %1480 = vmatprep.subr.mxu0 %v61
    %1481 = vmatpush1.msra.mxu0 %v60
    %1482 = vmatprep.subr.mxu0 %v57
    %1483 = vmatpush1.msra.mxu0 %v56
    %1484 = vmatprep.subr.mxu0 %v53
    %1485 = vmatpush1.msra.mxu0 %v52
    %1486 = vmatprep.subr.mxu0 %v49
    %1487 = vmatpush1.msra.mxu0 %v48
    %1488 = vmatprep.subr.mxu0 %v45
    %1489 = vmatpush1.msra.mxu0 %v44
    %1490 = vmatprep.subr.mxu0 %v41
    %1491 = vmatpush1.msra.mxu0 %v40
    %1492 = vmatprep.subr.mxu0 0.0
    %1493 = vmatpush2.msra.mxu0 0.0
    %1494 = vmatprep.subr.mxu0 0.0
    %1495 = vmatpush2.msra.mxu0 0.0
    %1496 = vmatprep.subr.mxu0 0.0
    %1497 = vmatpush2.msra.mxu0 0.0
    %1498 = vmatprep.subr.mxu0 0.0
    %1499 = vmatpush2.msra.mxu0 0.0
    %1500 = vmatprep.subr.mxu0 0.0
    %1501 = vmatpush2.msra.mxu0 0.0
    %1502 = vmatprep.subr.mxu0 0.0
    %1503 = vmatpush2.msra.mxu0 0.0
    %1504 = vmatprep.subr.mxu0 0.0
    %1505 = vmatpush2.msra.mxu0 0.0
    %1506 = vmatprep.subr.mxu0 0.0
    %1507 = vmatpush2.msra.mxu0 0.0
    %1508 = vmatprep.subr.mxu0 0.0
    %1509 = vmatpush2.msra.mxu0 0.0
    %1510 = vmatprep.subr.mxu0 0.0
    %1511 = vmatpush2.msra.mxu0 0.0
    %1512 = vmatprep.subr.mxu0 0.0
    %1513 = vmatpush2.msra.mxu0 0.0
    %1514 = vmatprep.subr.mxu0 0.0
    %1515 = vmatpush2.msra.mxu0 0.0
    %1516 = vmatprep.subr.mxu0 0.0
    %1517 = vmatpush2.msra.mxu0 0.0
    %1518 = vmatprep.subr.mxu0 0.0
    %1519 = vmatpush2.msra.mxu0 0.0
    %1520 = vmatprep.subr.mxu0 0.0
    %1521 = vmatpush2.msra.mxu0 0.0
    %1522 = vmatprep.subr.mxu0 0.0
    %1523 = vmatpush2.msra.mxu0 0.0
    %1524 = vmatprep.mubr.f32.mxu0 0.0
    %1525 = vmatmul.mubr.f32.gmra.mxu0 %v1384
    %v1526 = vpop.f32.mrf.mxu0
    %v1527 = vadd.f32 0.0, %v1526
    %v1528 = vpop.f32.mrf.mxu0
    %v1529 = vadd.f32 0.0, %v1528
    %1530 = vdwg.mxu0
    %v1535 = vcombine.low %v1456, %v1458
    %v1536 = vcombine.low %v1527, %v1529
    %v1538 = vunpack.c.l.s4 1983009808
    %v1539 = vunpack.c.0.s8 %v1538
    %v1540 = vlaneseq
    %v1541 = vshrl.u32 %v1540, 7
    %v1542 = vsub.s32 %v1539, %v1541
    %v1543 = vrot.slane %v1535, %v1542
    %v1545 = vunpack.c.l.s4 1983009808
    %v1546 = vunpack.c.0.s8 %v1545
    %v1547 = vlaneseq
    %v1548 = vshrl.u32 %v1547, 7
    %v1549 = vsub.s32 %v1546, %v1548
    %v1550 = vrot.slane %v1536, %v1549
    %v1551 = vcombine.low %v1543, %v1550
    %v1553 = vadd.f32 %v1388, %v1551
    %v1554 = vxor.u32 %v1553, 2147483648
    %v1555 = vmul.f32 %v1554, 1.442695
    %v1556 = vpow.pop %v1555
    %v1557 = vadd.f32 %v1556, 1.0
    %v1558 = vrcp.pop %v1557
    %v1559 = vmul.f32 1.0, %v1558
    %v1561 = vrot.slane %v1553, 6
    %v1563 = vtanh.pop %v1561
    %v1565 = vrot.slane %v1559, 2
    %v1567 = vmul.f32 %v1565, %v1380
    %v1568 = vmul.f32 %v1559, %v1563
    %v1569 = vadd.f32 %v1567, %v1568
    %v1570 = vtanh.pop %v1569
    %v1571 = vrot.slane %v1559, 4
    %v1573 = vmul.f32 %v1571, %v1570
    %s1574 = scalar_lea.vmem [#allocation4], 10
    %1575 = vst [vmem:[%s1574] sm:$0x3] %v1573
    %s1576 = scalar_lea.vmem [#allocation5], 48
    %v1577 = vld [vmem:[%s1576] sm:$0xff]
    %1578 = vmatprep.subr.mxu0 %v99
    %1579 = vmatpush1.msra.mxu0 %v98
    %1580 = vmatprep.subr.mxu0 %v95
    %1581 = vmatpush1.msra.mxu0 %v94
    %1582 = vmatprep.subr.mxu0 %v91
    %1583 = vmatpush1.msra.mxu0 %v90
    %1584 = vmatprep.subr.mxu0 %v87
    %1585 = vmatpush1.msra.mxu0 %v86
    %1586 = vmatprep.subr.mxu0 %v83
    %1587 = vmatpush1.msra.mxu0 %v82
    %1588 = vmatprep.subr.mxu0 %v79
    %1589 = vmatpush1.msra.mxu0 %v78
    %1590 = vmatprep.subr.mxu0 %v75
    %1591 = vmatpush1.msra.mxu0 %v74
    %1592 = vmatprep.subr.mxu0 %v71
    %1593 = vmatpush1.msra.mxu0 %v70
    %1594 = vmatprep.subr.mxu0 %v67
    %1595 = vmatpush1.msra.mxu0 %v66
    %1596 = vmatprep.subr.mxu0 %v63
    %1597 = vmatpush1.msra.mxu0 %v62
    %1598 = vmatprep.subr.mxu0 %v59
    %1599 = vmatpush1.msra.mxu0 %v58
    %1600 = vmatprep.subr.mxu0 %v55
    %1601 = vmatpush1.msra.mxu0 %v54
    %1602 = vmatprep.subr.mxu0 %v51
    %1603 = vmatpush1.msra.mxu0 %v50
    %1604 = vmatprep.subr.mxu0 %v47
    %1605 = vmatpush1.msra.mxu0 %v46
    %1606 = vmatprep.subr.mxu0 %v43
    %1607 = vmatpush1.msra.mxu0 %v42
    %1608 = vmatprep.subr.mxu0 %v39
    %1609 = vmatpush1.msra.mxu0 %v38
    %1610 = vmatprep.subr.mxu0 0.0
    %1611 = vmatpush2.msra.mxu0 0.0
    %1612 = vmatprep.subr.mxu0 0.0
    %1613 = vmatpush2.msra.mxu0 0.0
    %1614 = vmatprep.subr.mxu0 0.0
    %1615 = vmatpush2.msra.mxu0 0.0
    %1616 = vmatprep.subr.mxu0 0.0
    %1617 = vmatpush2.msra.mxu0 0.0
    %1618 = vmatprep.subr.mxu0 0.0
    %1619 = vmatpush2.msra.mxu0 0.0
    %1620 = vmatprep.subr.mxu0 0.0
    %1621 = vmatpush2.msra.mxu0 0.0
    %1622 = vmatprep.subr.mxu0 0.0
    %1623 = vmatpush2.msra.mxu0 0.0
    %1624 = vmatprep.subr.mxu0 0.0
    %1625 = vmatpush2.msra.mxu0 0.0
    %1626 = vmatprep.subr.mxu0 0.0
    %1627 = vmatpush2.msra.mxu0 0.0
    %1628 = vmatprep.subr.mxu0 0.0
    %1629 = vmatpush2.msra.mxu0 0.0
    %1630 = vmatprep.subr.mxu0 0.0
    %1631 = vmatpush2.msra.mxu0 0.0
    %1632 = vmatprep.subr.mxu0 0.0
    %1633 = vmatpush2.msra.mxu0 0.0
    %1634 = vmatprep.subr.mxu0 0.0
    %1635 = vmatpush2.msra.mxu0 0.0
    %1636 = vmatprep.subr.mxu0 0.0
    %1637 = vmatpush2.msra.mxu0 0.0
    %1638 = vmatprep.subr.mxu0 0.0
    %1639 = vmatpush2.msra.mxu0 0.0
    %1640 = vmatprep.subr.mxu0 0.0
    %1641 = vmatpush2.msra.mxu0 0.0
    %1642 = vmatprep.mubr.f32.mxu0 0.0
    %1643 = vmatmul.mubr.f32.gmra.mxu0 %v1573
    %v1644 = vpop.f32.mrf.mxu0
    %v1645 = vadd.f32 0.0, %v1644
    %v1646 = vpop.f32.mrf.mxu0
    %v1647 = vadd.f32 0.0, %v1646
    %1648 = vdwg.mxu0
    %1649 = vmatprep.subr.mxu0 %v101
    %1650 = vmatpush1.msra.mxu0 %v100
    %1651 = vmatprep.subr.mxu0 %v97
    %1652 = vmatpush1.msra.mxu0 %v96
    %1653 = vmatprep.subr.mxu0 %v93
    %1654 = vmatpush1.msra.mxu0 %v92
    %1655 = vmatprep.subr.mxu0 %v89
    %1656 = vmatpush1.msra.mxu0 %v88
    %1657 = vmatprep.subr.mxu0 %v85
    %1658 = vmatpush1.msra.mxu0 %v84
    %1659 = vmatprep.subr.mxu0 %v81
    %1660 = vmatpush1.msra.mxu0 %v80
    %1661 = vmatprep.subr.mxu0 %v77
    %1662 = vmatpush1.msra.mxu0 %v76
    %1663 = vmatprep.subr.mxu0 %v73
    %1664 = vmatpush1.msra.mxu0 %v72
    %1665 = vmatprep.subr.mxu0 %v69
    %1666 = vmatpush1.msra.mxu0 %v68
    %1667 = vmatprep.subr.mxu0 %v65
    %1668 = vmatpush1.msra.mxu0 %v64
    %1669 = vmatprep.subr.mxu0 %v61
    %1670 = vmatpush1.msra.mxu0 %v60
    %1671 = vmatprep.subr.mxu0 %v57
    %1672 = vmatpush1.msra.mxu0 %v56
    %1673 = vmatprep.subr.mxu0 %v53
    %1674 = vmatpush1.msra.mxu0 %v52
    %1675 = vmatprep.subr.mxu0 %v49
    %1676 = vmatpush1.msra.mxu0 %v48
    %1677 = vmatprep.subr.mxu0 %v45
    %1678 = vmatpush1.msra.mxu0 %v44
    %1679 = vmatprep.subr.mxu0 %v41
    %1680 = vmatpush1.msra.mxu0 %v40
    %1681 = vmatprep.subr.mxu0 0.0
    %1682 = vmatpush2.msra.mxu0 0.0
    %1683 = vmatprep.subr.mxu0 0.0
    %1684 = vmatpush2.msra.mxu0 0.0
    %1685 = vmatprep.subr.mxu0 0.0
    %1686 = vmatpush2.msra.mxu0 0.0
    %1687 = vmatprep.subr.mxu0 0.0
    %1688 = vmatpush2.msra.mxu0 0.0
    %1689 = vmatprep.subr.mxu0 0.0
    %1690 = vmatpush2.msra.mxu0 0.0
    %1691 = vmatprep.subr.mxu0 0.0
    %1692 = vmatpush2.msra.mxu0 0.0
    %1693 = vmatprep.subr.mxu0 0.0
    %1694 = vmatpush2.msra.mxu0 0.0
    %1695 = vmatprep.subr.mxu0 0.0
    %1696 = vmatpush2.msra.mxu0 0.0
    %1697 = vmatprep.subr.mxu0 0.0
    %1698 = vmatpush2.msra.mxu0 0.0
    %1699 = vmatprep.subr.mxu0 0.0
    %1700 = vmatpush2.msra.mxu0 0.0
    %1701 = vmatprep.subr.mxu0 0.0
    %1702 = vmatpush2.msra.mxu0 0.0
    %1703 = vmatprep.subr.mxu0 0.0
    %1704 = vmatpush2.msra.mxu0 0.0
    %1705 = vmatprep.subr.mxu0 0.0
    %1706 = vmatpush2.msra.mxu0 0.0
    %1707 = vmatprep.subr.mxu0 0.0
    %1708 = vmatpush2.msra.mxu0 0.0
    %1709 = vmatprep.subr.mxu0 0.0
    %1710 = vmatpush2.msra.mxu0 0.0
    %1711 = vmatprep.subr.mxu0 0.0
    %1712 = vmatpush2.msra.mxu0 0.0
    %1713 = vmatprep.mubr.f32.mxu0 0.0
    %1714 = vmatmul.mubr.f32.gmra.mxu0 %v1573
    %v1715 = vpop.f32.mrf.mxu0
    %v1716 = vadd.f32 0.0, %v1715
    %v1717 = vpop.f32.mrf.mxu0
    %v1718 = vadd.f32 0.0, %v1717
    %1719 = vdwg.mxu0
    %v1724 = vcombine.low %v1645, %v1647
    %v1725 = vcombine.low %v1716, %v1718
    %v1727 = vunpack.c.l.s4 1983009808
    %v1728 = vunpack.c.0.s8 %v1727
    %v1729 = vlaneseq
    %v1730 = vshrl.u32 %v1729, 7
    %v1731 = vsub.s32 %v1728, %v1730
    %v1732 = vrot.slane %v1724, %v1731
    %v1734 = vunpack.c.l.s4 1983009808
    %v1735 = vunpack.c.0.s8 %v1734
    %v1736 = vlaneseq
    %v1737 = vshrl.u32 %v1736, 7
    %v1738 = vsub.s32 %v1735, %v1737
    %v1739 = vrot.slane %v1725, %v1738
    %v1740 = vcombine.low %v1732, %v1739
    %v1742 = vadd.f32 %v1577, %v1740
    %v1743 = vxor.u32 %v1742, 2147483648
    %v1744 = vmul.f32 %v1743, 1.442695
    %v1745 = vpow.pop %v1744
    %v1746 = vadd.f32 %v1745, 1.0
    %v1747 = vrcp.pop %v1746
    %v1748 = vmul.f32 1.0, %v1747
    %v1750 = vrot.slane %v1742, 6
    %v1752 = vtanh.pop %v1750
    %v1754 = vrot.slane %v1748, 2
    %v1756 = vmul.f32 %v1754, %v1569
    %v1757 = vmul.f32 %v1748, %v1752
    %v1758 = vadd.f32 %v1756, %v1757
    %v1759 = vtanh.pop %v1758
    %v1760 = vrot.slane %v1748, 4
    %v1762 = vmul.f32 %v1760, %v1759
    %s1763 = scalar_lea.vmem [#allocation4], 12
    %1764 = vst [vmem:[%s1763] sm:$0x3] %v1762
    %s1765 = scalar_lea.vmem [#allocation5], 56
    %v1766 = vld [vmem:[%s1765] sm:$0xff]
    %1767 = vmatprep.subr.mxu0 %v99
    %1768 = vmatpush1.msra.mxu0 %v98
    %1769 = vmatprep.subr.mxu0 %v95
    %1770 = vmatpush1.msra.mxu0 %v94
    %1771 = vmatprep.subr.mxu0 %v91
    %1772 = vmatpush1.msra.mxu0 %v90
    %1773 = vmatprep.subr.mxu0 %v87
    %1774 = vmatpush1.msra.mxu0 %v86
    %1775 = vmatprep.subr.mxu0 %v83
    %1776 = vmatpush1.msra.mxu0 %v82
    %1777 = vmatprep.subr.mxu0 %v79
    %1778 = vmatpush1.msra.mxu0 %v78
    %1779 = vmatprep.subr.mxu0 %v75
    %1780 = vmatpush1.msra.mxu0 %v74
    %1781 = vmatprep.subr.mxu0 %v71
    %1782 = vmatpush1.msra.mxu0 %v70
    %1783 = vmatprep.subr.mxu0 %v67
    %1784 = vmatpush1.msra.mxu0 %v66
    %1785 = vmatprep.subr.mxu0 %v63
    %1786 = vmatpush1.msra.mxu0 %v62
    %1787 = vmatprep.subr.mxu0 %v59
    %1788 = vmatpush1.msra.mxu0 %v58
    %1789 = vmatprep.subr.mxu0 %v55
    %1790 = vmatpush1.msra.mxu0 %v54
    %1791 = vmatprep.subr.mxu0 %v51
    %1792 = vmatpush1.msra.mxu0 %v50
    %1793 = vmatprep.subr.mxu0 %v47
    %1794 = vmatpush1.msra.mxu0 %v46
    %1795 = vmatprep.subr.mxu0 %v43
    %1796 = vmatpush1.msra.mxu0 %v42
    %1797 = vmatprep.subr.mxu0 %v39
    %1798 = vmatpush1.msra.mxu0 %v38
    %1799 = vmatprep.subr.mxu0 0.0
    %1800 = vmatpush2.msra.mxu0 0.0
    %1801 = vmatprep.subr.mxu0 0.0
    %1802 = vmatpush2.msra.mxu0 0.0
    %1803 = vmatprep.subr.mxu0 0.0
    %1804 = vmatpush2.msra.mxu0 0.0
    %1805 = vmatprep.subr.mxu0 0.0
    %1806 = vmatpush2.msra.mxu0 0.0
    %1807 = vmatprep.subr.mxu0 0.0
    %1808 = vmatpush2.msra.mxu0 0.0
    %1809 = vmatprep.subr.mxu0 0.0
    %1810 = vmatpush2.msra.mxu0 0.0
    %1811 = vmatprep.subr.mxu0 0.0
    %1812 = vmatpush2.msra.mxu0 0.0
    %1813 = vmatprep.subr.mxu0 0.0
    %1814 = vmatpush2.msra.mxu0 0.0
    %1815 = vmatprep.subr.mxu0 0.0
    %1816 = vmatpush2.msra.mxu0 0.0
    %1817 = vmatprep.subr.mxu0 0.0
    %1818 = vmatpush2.msra.mxu0 0.0
    %1819 = vmatprep.subr.mxu0 0.0
    %1820 = vmatpush2.msra.mxu0 0.0
    %1821 = vmatprep.subr.mxu0 0.0
    %1822 = vmatpush2.msra.mxu0 0.0
    %1823 = vmatprep.subr.mxu0 0.0
    %1824 = vmatpush2.msra.mxu0 0.0
    %1825 = vmatprep.subr.mxu0 0.0
    %1826 = vmatpush2.msra.mxu0 0.0
    %1827 = vmatprep.subr.mxu0 0.0
    %1828 = vmatpush2.msra.mxu0 0.0
    %1829 = vmatprep.subr.mxu0 0.0
    %1830 = vmatpush2.msra.mxu0 0.0
    %1831 = vmatprep.mubr.f32.mxu0 0.0
    %1832 = vmatmul.mubr.f32.gmra.mxu0 %v1762
    %v1833 = vpop.f32.mrf.mxu0
    %v1834 = vadd.f32 0.0, %v1833
    %v1835 = vpop.f32.mrf.mxu0
    %v1836 = vadd.f32 0.0, %v1835
    %1837 = vdwg.mxu0
    %1838 = vmatprep.subr.mxu0 %v101
    %1839 = vmatpush1.msra.mxu0 %v100
    %1840 = vmatprep.subr.mxu0 %v97
    %1841 = vmatpush1.msra.mxu0 %v96
    %1842 = vmatprep.subr.mxu0 %v93
    %1843 = vmatpush1.msra.mxu0 %v92
    %1844 = vmatprep.subr.mxu0 %v89
    %1845 = vmatpush1.msra.mxu0 %v88
    %1846 = vmatprep.subr.mxu0 %v85
    %1847 = vmatpush1.msra.mxu0 %v84
    %1848 = vmatprep.subr.mxu0 %v81
    %1849 = vmatpush1.msra.mxu0 %v80
    %1850 = vmatprep.subr.mxu0 %v77
    %1851 = vmatpush1.msra.mxu0 %v76
    %1852 = vmatprep.subr.mxu0 %v73
    %1853 = vmatpush1.msra.mxu0 %v72
    %1854 = vmatprep.subr.mxu0 %v69
    %1855 = vmatpush1.msra.mxu0 %v68
    %1856 = vmatprep.subr.mxu0 %v65
    %1857 = vmatpush1.msra.mxu0 %v64
    %1858 = vmatprep.subr.mxu0 %v61
    %1859 = vmatpush1.msra.mxu0 %v60
    %1860 = vmatprep.subr.mxu0 %v57
    %1861 = vmatpush1.msra.mxu0 %v56
    %1862 = vmatprep.subr.mxu0 %v53
    %1863 = vmatpush1.msra.mxu0 %v52
    %1864 = vmatprep.subr.mxu0 %v49
    %1865 = vmatpush1.msra.mxu0 %v48
    %1866 = vmatprep.subr.mxu0 %v45
    %1867 = vmatpush1.msra.mxu0 %v44
    %1868 = vmatprep.subr.mxu0 %v41
    %1869 = vmatpush1.msra.mxu0 %v40
    %1870 = vmatprep.subr.mxu0 0.0
    %1871 = vmatpush2.msra.mxu0 0.0
    %1872 = vmatprep.subr.mxu0 0.0
    %1873 = vmatpush2.msra.mxu0 0.0
    %1874 = vmatprep.subr.mxu0 0.0
    %1875 = vmatpush2.msra.mxu0 0.0
    %1876 = vmatprep.subr.mxu0 0.0
    %1877 = vmatpush2.msra.mxu0 0.0
    %1878 = vmatprep.subr.mxu0 0.0
    %1879 = vmatpush2.msra.mxu0 0.0
    %1880 = vmatprep.subr.mxu0 0.0
    %1881 = vmatpush2.msra.mxu0 0.0
    %1882 = vmatprep.subr.mxu0 0.0
    %1883 = vmatpush2.msra.mxu0 0.0
    %1884 = vmatprep.subr.mxu0 0.0
    %1885 = vmatpush2.msra.mxu0 0.0
    %1886 = vmatprep.subr.mxu0 0.0
    %1887 = vmatpush2.msra.mxu0 0.0
    %1888 = vmatprep.subr.mxu0 0.0
    %1889 = vmatpush2.msra.mxu0 0.0
    %1890 = vmatprep.subr.mxu0 0.0
    %1891 = vmatpush2.msra.mxu0 0.0
    %1892 = vmatprep.subr.mxu0 0.0
    %1893 = vmatpush2.msra.mxu0 0.0
    %1894 = vmatprep.subr.mxu0 0.0
    %1895 = vmatpush2.msra.mxu0 0.0
    %1896 = vmatprep.subr.mxu0 0.0
    %1897 = vmatpush2.msra.mxu0 0.0
    %1898 = vmatprep.subr.mxu0 0.0
    %1899 = vmatpush2.msra.mxu0 0.0
    %1900 = vmatprep.subr.mxu0 0.0
    %1901 = vmatpush2.msra.mxu0 0.0
    %1902 = vmatprep.mubr.f32.mxu0 0.0
    %1903 = vmatmul.mubr.f32.gmra.mxu0 %v1762
    %v1904 = vpop.f32.mrf.mxu0
    %v1905 = vadd.f32 0.0, %v1904
    %v1906 = vpop.f32.mrf.mxu0
    %v1907 = vadd.f32 0.0, %v1906
    %1908 = vdwg.mxu0
    %v1913 = vcombine.low %v1834, %v1836
    %v1914 = vcombine.low %v1905, %v1907
    %v1916 = vunpack.c.l.s4 1983009808
    %v1917 = vunpack.c.0.s8 %v1916
    %v1918 = vlaneseq
    %v1919 = vshrl.u32 %v1918, 7
    %v1920 = vsub.s32 %v1917, %v1919
    %v1921 = vrot.slane %v1913, %v1920
    %v1923 = vunpack.c.l.s4 1983009808
    %v1924 = vunpack.c.0.s8 %v1923
    %v1925 = vlaneseq
    %v1926 = vshrl.u32 %v1925, 7
    %v1927 = vsub.s32 %v1924, %v1926
    %v1928 = vrot.slane %v1914, %v1927
    %v1929 = vcombine.low %v1921, %v1928
    %v1931 = vadd.f32 %v1766, %v1929
    %v1932 = vxor.u32 %v1931, 2147483648
    %v1933 = vmul.f32 %v1932, 1.442695
    %v1934 = vpow.pop %v1933
    %v1935 = vadd.f32 %v1934, 1.0
    %v1936 = vrcp.pop %v1935
    %v1937 = vmul.f32 1.0, %v1936
    %v1939 = vrot.slane %v1931, 6
    %v1941 = vtanh.pop %v1939
    %v1943 = vrot.slane %v1937, 2
    %v1945 = vmul.f32 %v1943, %v1758
    %v1946 = vmul.f32 %v1937, %v1941
    %v1947 = vadd.f32 %v1945, %v1946
    %v1948 = vtanh.pop %v1947
    %v1949 = vrot.slane %v1937, 4
    %v1951 = vmul.f32 %v1949, %v1948
    %s1952 = scalar_lea.vmem [#allocation4], 14
    %1953 = vst [vmem:[%s1952] sm:$0x3] %v1951
    %1954 = vst [vmem:[#allocation2] sm:$0x3] %v1951
    %1955 = vst [vmem:[#allocation3] sm:$0x3] %v1947
    %v1956 = vld [vmem:[#allocation4] sm:$0x3]
    %v1957 = vld [vmem:[#allocation4 + $0x2] sm:$0x3]
    %v1958 = vld [vmem:[#allocation4 + $0x4] sm:$0x3]
    %v1959 = vld [vmem:[#allocation4 + $0x6] sm:$0x3]
    %v1960 = vld [vmem:[#allocation4 + $0x8] sm:$0x3]
    %v1961 = vld [vmem:[#allocation4 + $0xa] sm:$0x3]
    %v1962 = vld [vmem:[#allocation4 + $0xc] sm:$0x3]
    %v1963 = vld [vmem:[#allocation4 + $0xe] sm:$0x3]
    %v1964 = vld [vmem:[%s5] sm:$0x1]
    %v1966 = vlaneseq
    %v1967 = vshrl.u32 %v1966, 7
    %v1968 = vsub.s32 0, %v1967
    %v1969 = vrot.slane %v1964, %v1968
    %v1971 = vmul.f32 %v1956, %v1969
    %v1972 = vmul.f32 %v1957, %v1969
    %v1973 = vmul.f32 %v1958, %v1969
    %v1974 = vmul.f32 %v1959, %v1969
    %v1975 = vmul.f32 %v1960, %v1969
    %v1976 = vmul.f32 %v1961, %v1969
    %v1977 = vmul.f32 %v1962, %v1969
    %v1978 = vmul.f32 %v1963, %v1969
    %vm1979 = vcmask 1041408
    %v1980 = vsel %vm1979, %v1971, 0.0
    %1981 = vadd.xlane.f32.xlu0 %v1980
    %v1982 = vpop.xlane.xlu0 %1981
    %v1983 = vsel %vm1979, %v1972, 0.0
    %1984 = vadd.xlane.f32.xlu0 %v1983
    %v1985 = vpop.xlane.xlu0 %1984
    %v1986 = vsel %vm1979, %v1973, 0.0
    %1987 = vadd.xlane.f32.xlu0 %v1986
    %v1988 = vpop.xlane.xlu0 %1987
    %v1989 = vsel %vm1979, %v1974, 0.0
    %1990 = vadd.xlane.f32.xlu0 %v1989
    %v1991 = vpop.xlane.xlu0 %1990
    %v1992 = vsel %vm1979, %v1975, 0.0
    %1993 = vadd.xlane.f32.xlu0 %v1992
    %v1994 = vpop.xlane.xlu0 %1993
    %v1995 = vsel %vm1979, %v1976, 0.0
    %1996 = vadd.xlane.f32.xlu0 %v1995
    %v1997 = vpop.xlane.xlu0 %1996
    %v1998 = vsel %vm1979, %v1977, 0.0
    %1999 = vadd.xlane.f32.xlu0 %v1998
    %v2000 = vpop.xlane.xlu0 %1999
    %v2001 = vsel %vm1979, %v1978, 0.0
    %2002 = vadd.xlane.f32.xlu0 %v2001
    %v2003 = vpop.xlane.xlu0 %2002
    %v2004 = vld [vmem:[%s1] sm:$0xf]
    %v2005 = vld [vmem:[%s1 + $0x4] sm:$0xf]
    %v2006 = vld [vmem:[%s6] sm:$0xf]
    %2008 = vset.pattern.permute.xlu0 0
    %2009 = vperm.xlu0 %2008, %v2006
    %v2010 = vpop.permute.xlu0 %2009
    %v2012 = vmul.f32 %v2004, %v2010
    %v2013 = vmul.f32 %v2005, %v2010
    %vm2014 = vcmask 60416
    %v2015 = vsel %vm2014, %v2012, 0.0
    %v2016 = vrot.slane %v2015, 4
    %v2017 = vadd.f32 %v2015, %v2016
    %v2018 = vrot.slane %v2017, 2
    %v2019 = vadd.f32 %v2017, %v2018
    %v2020 = vrot.slane %v2019, 1
    %v2021 = vadd.f32 %v2019, %v2020
    %v2022 = vsel %vm2014, %v2013, 0.0
    %v2023 = vrot.slane %v2022, 4
    %v2024 = vadd.f32 %v2022, %v2023
    %v2025 = vrot.slane %v2024, 2
    %v2026 = vadd.f32 %v2024, %v2025
    %v2027 = vrot.slane %v2026, 1
    %v2028 = vadd.f32 %v2026, %v2027
    %v2037 = vlaneseq
    %v2038 = vand.u32 %v2037, 127
    %v2039 = vlaneseq
    %v2040 = vshrl.u32 %v2039, 7
    %v2041 = vsub.s32 %v2038, %v2040
    %v2042 = vrot.slane %v1982, %v2041
    %v2043 = vlaneseq
    %v2044 = vshrl.u32 %v2043, 7
    %v2045 = vsub.s32 %v2038, %v2044
    %v2046 = vrot.slane %v1985, %v2045
    %v2047 = vlaneseq
    %v2048 = vshrl.u32 %v2047, 7
    %v2049 = vsub.s32 %v2038, %v2048
    %v2050 = vrot.slane %v1988, %v2049
    %v2051 = vlaneseq
    %v2052 = vshrl.u32 %v2051, 7
    %v2053 = vsub.s32 %v2038, %v2052
    %v2054 = vrot.slane %v1991, %v2053
    %v2055 = vlaneseq
    %v2056 = vshrl.u32 %v2055, 7
    %v2057 = vsub.s32 %v2038, %v2056
    %v2058 = vrot.slane %v1994, %v2057
    %v2059 = vlaneseq
    %v2060 = vshrl.u32 %v2059, 7
    %v2061 = vsub.s32 %v2038, %v2060
    %v2062 = vrot.slane %v1997, %v2061
    %v2063 = vlaneseq
    %v2064 = vshrl.u32 %v2063, 7
    %v2065 = vsub.s32 %v2038, %v2064
    %v2066 = vrot.slane %v2000, %v2065
    %v2067 = vlaneseq
    %v2068 = vshrl.u32 %v2067, 7
    %v2069 = vsub.s32 %v2038, %v2068
    %v2070 = vrot.slane %v2003, %v2069
    %vm2071 = vcmask 1041409
    %v2072 = vsel %vm2071, %v2046, %v2042
    %vm2073 = vcmask 1042434
    %v2074 = vsel %vm2073, %v2050, %v2072
    %vm2075 = vcmask 1043459
    %v2076 = vsel %vm2075, %v2054, %v2074
    %vm2077 = vcmask 1044484
    %v2078 = vsel %vm2077, %v2058, %v2076
    %vm2079 = vcmask 1045509
    %v2080 = vsel %vm2079, %v2062, %v2078
    %vm2081 = vcmask 1046534
    %v2082 = vsel %vm2081, %v2066, %v2080
    %vm2083 = vcmask 1047559
    %v2084 = vsel %vm2083, %v2070, %v2082
    %2086 = vxpose.xlu0.b32.start [1/16] %v2084, 128
    %2087 = vxpose.xlu0.b32.cont [2/16] 0.0, 128
    %2088 = vxpose.xlu0.b32.cont [3/16] 0.0, 128
    %2089 = vxpose.xlu0.b32.cont [4/16] 0.0, 128
    %2090 = vxpose.xlu0.b32.cont [5/16] 0.0, 128
    %2091 = vxpose.xlu0.b32.cont [6/16] 0.0, 128
    %2092 = vxpose.xlu0.b32.cont [7/16] 0.0, 128
    %2093 = vxpose.xlu0.b32.cont [8/16] 0.0, 128
    %2094 = vxpose.xlu0.b32.cont [9/16] 0.0, 128
    %2095 = vxpose.xlu0.b32.cont [10/16] 0.0, 128
    %2096 = vxpose.xlu0.b32.cont [11/16] 0.0, 128
    %2097 = vxpose.xlu0.b32.cont [12/16] 0.0, 128
    %2098 = vxpose.xlu0.b32.cont [13/16] 0.0, 128
    %2099 = vxpose.xlu0.b32.cont [14/16] 0.0, 128
    %2100 = vxpose.xlu0.b32.cont [15/16] 0.0, 128
    %2101 = vxpose.xlu0.b32.end [16/16] 0.0, 128
    %v2102 = vpop.trf.xlu0
    %v2103 = vpop.trf.xlu0
    %v2104 = vpop.trf.xlu0
    %v2105 = vpop.trf.xlu0
    %v2106 = vpop.trf.xlu0
    %v2107 = vpop.trf.xlu0
    %v2108 = vpop.trf.xlu0
    %v2109 = vpop.trf.xlu0
    %v2110 = vpop.trf.xlu0
    %v2111 = vpop.trf.xlu0
    %v2112 = vpop.trf.xlu0
    %v2113 = vpop.trf.xlu0
    %v2114 = vpop.trf.xlu0
    %v2115 = vpop.trf.xlu0
    %v2116 = vpop.trf.xlu0
    %v2117 = vpop.trf.xlu0
    %v2120 = vsel %vm2071, %v2028, %v2021
    %v2122 = vadd.f32 %v2102, %v2120
    %v2123 = vld [vmem:[#allocation6] sm:$0x1]
    %v2125 = vlaneseq
    %v2126 = vshrl.u32 %v2125, 7
    %v2127 = vsub.s32 0, %v2126
    %v2128 = vrot.slane %v2123, %v2127
    %2129 = vset.pattern.permute.xlu0 0
    %2130 = vperm.xlu0 %2129, %v2128
    %v2131 = vpop.permute.xlu0 %2130
    %v2133 = vadd.f32 %v2122, %v2131
    %vm2134 = vcmask 58368
    %2135 = vst.msk [vmem:[#allocation7] sm:$0x3] %vm2134, %v2133
    // Predicated region
    $region38: #{super_music_model_pallas.1} parent=1 // pred_check
      _
    $region39: #{super_music_model_pallas.1} parent=1 // pred_check_branch
      %2137 = sbr.rel (0) target = $region41
    $region40: #{super_music_model_pallas.1} parent=1 // pred_region
      %s2139 = ssub.s32 32, 32
      %2140 = vsyncadd [#allocation8], %s2139
      %s2142 = sshll.u32 [#allocation7], 4
      %s2143 = int_to_ptr.vmem [resolvable:$true] %s2142
      %2145 = dma.vmem_to_hbm [thread:$0]  %s2143, 32, %s8, [#allocation8]
    $region41: #{super_music_model_pallas.1} parent=1 // pred_fallthru
      _
    // Predicated region
    $region42: #{super_music_model_pallas.1} parent=1 // pred_check
      _
    $region43: #{super_music_model_pallas.1} parent=1 // pred_check_branch
      %2147 = sbr.rel (0) target = $region45
    $region44: #{super_music_model_pallas.1} parent=1 // pred_region
      %2148 = dma.done [#allocation8], 32
    $region45: #{super_music_model_pallas.1} parent=1 // pred_fallthru
      _
    %2149 = vsyncpa [#allocation8], 1

</llo_original>
